<compile_context>
chip_gen: v5e
topology: v5e:2x2
jax: 0.10.0
libtpu: 0.0.40
codegen_flags: <defaults>
</compile_context>

<pallas_src>
import functools

import jax
import jax.numpy as jnp
from jax import lax
from jax.experimental import pallas as pl
from jax.experimental.pallas import tpu as pltpu


def _mhsa_kernel(x_ref, w_ref, b_ref, pos_ref, o_ref, *, heads, dh):
    # x_ref  : (1, C, L)        this batch element, all channels, full sequence
    # w_ref  : (3C, C)          stacked [wq; wk; wv]
    # b_ref  : (3C, 1)          stacked [bq; bk; bv]
    # pos_ref: (heads, dh, L)   (rel_h + rel_w) flattened
    # o_ref  : (1, dh, heads*L) head h occupies lane columns [h*L, (h+1)*L)
    C = heads * dh
    x = x_ref[0]  # (C, L)

    # Fused 1x1-conv projection for q, k, v of all heads: (3C, C) @ (C, L).
    qkv = jnp.dot(w_ref[...], x, preferred_element_type=jnp.float32) + b_ref[...]

    outs = []
    for h in range(heads):  # heads is small & static -> unrolled at trace time
        q = qkv[h * dh:(h + 1) * dh, :]            # (dh, L)
        k = qkv[C + h * dh:C + (h + 1) * dh, :]    # (dh, L)
        v = qkv[2 * C + h * dh:2 * C + (h + 1) * dh, :]  # (dh, L)
        pos = pos_ref[h]                           # (dh, L)

        # content_content[l, m] = sum_d q[d, l] * k[d, m]   (q^T @ k)
        cc = lax.dot_general(q, k, (((0,), (0,)), ((), ())),
                             preferred_element_type=jnp.float32)     # (L, L)
        # content_position[l, m] = sum_d pos[d, l] * q[d, m] (pos^T @ q)
        cp = lax.dot_general(pos, q, (((0,), (0,)), ((), ())),
                             preferred_element_type=jnp.float32)     # (L, L)

        energy = cc + cp
        m = jnp.max(energy, axis=-1, keepdims=True)
        e = jnp.exp(energy - m)
        inv_sum = pl.reciprocal(jnp.sum(e, axis=-1, keepdims=True), approx=True)
        attn = e * inv_sum                                            # (L, L)

        # out[d, m] = sum_l v[d, l] * attn[m, l]   (v @ attn^T)
        out_h = lax.dot_general(v, attn, (((1,), (1,)), ((), ())),
                                preferred_element_type=jnp.float32)   # (dh, L)
        outs.append(out_h)

    # Single lane-dense store: (dh, heads*L), last dim is a multiple of 128.
    o_ref[0] = jnp.concatenate(outs, axis=-1).astype(o_ref.dtype)


def mhsa_pallas(x_nchw, params, heads):
    N, C, W, H = x_nchw.shape
    dh = C // heads
    L = W * H

    x = x_nchw.reshape(N, C, L).astype(jnp.float32)

    # (rel_h + rel_w) -> (heads, dh, L)
    pos = (params["rel_h"] + params["rel_w"]).reshape(heads, dh, L).astype(jnp.float32)

    # Fuse the three 1x1-conv weights / biases into single operands.
    w_fused = jnp.concatenate(
        [params["wq"], params["wk"], params["wv"]], axis=0).astype(jnp.float32)      # (3C, C)
    b_fused = jnp.concatenate(
        [params["bq"], params["bk"], params["bv"]], axis=0).astype(jnp.float32)      # (3C,)
    b_fused = b_fused.reshape(3 * C, 1)

    kernel = functools.partial(_mhsa_kernel, heads=heads, dh=dh)

    out = pl.pallas_call(
        kernel,
        out_shape=jax.ShapeDtypeStruct((N, dh, heads * L), jnp.float32),
        grid_spec=pltpu.PrefetchScalarGridSpec(
            num_scalar_prefetch=0,
            grid=(N,),
            in_specs=[
                pl.BlockSpec((1, C, L), lambda n: (n, 0, 0)),        # x (per batch)
                pl.BlockSpec((3 * C, C), lambda n: (0, 0)),          # fused weights (invariant)
                pl.BlockSpec((3 * C, 1), lambda n: (0, 0)),          # fused bias    (invariant)
                pl.BlockSpec((heads, dh, L), lambda n: (0, 0, 0)),   # pos           (invariant)
            ],
            out_specs=pl.BlockSpec((1, dh, heads * L), lambda n: (n, 0, 0)),
        ),
        compiler_params=pltpu.CompilerParams(
            dimension_semantics=("parallel",),
            vmem_limit_bytes=32 * 1024 * 1024,
        ),
    )(x, w_fused, b_fused, pos)

    # (N, dh, heads*L) -> (N, dh, heads, L) -> (N, heads, dh, L) -> (N, C, W, H)
    out = out.reshape(N, dh, heads, L).transpose(0, 2, 1, 3).reshape(N, C, W, H)
    return out


def mhsa_reference(x_nchw, params, heads):
    """Pure-JAX reference replicating the PyTorch forward exactly."""
    N, C, W, H = x_nchw.shape
    dh = C // heads
    L = W * H
    x = x_nchw.reshape(N, C, L).astype(jnp.float32)

    def proj(w, b):
        y = jnp.einsum("oc,ncl->nol", w, x) + b[None, :, None]
        return y.reshape(N, heads, dh, L)

    q = proj(params["wq"], params["bq"])
    k = proj(params["wk"], params["bk"])
    v = proj(params["wv"], params["bv"])

    cc = jnp.einsum("nhdl,nhdm->nhlm", q, k)  # q^T @ k
    pos = (params["rel_h"] + params["rel_w"]).reshape(1, heads, dh, L)
    cp = jnp.einsum("xhld,nhdm->nhlm", jnp.transpose(pos, (0, 1, 3, 2)), q)
    energy = cc + cp
    attn = jax.nn.softmax(energy, axis=-1)
    out = jnp.einsum("nhdl,nhml->nhdm", v, attn)  # v @ attn^T
    return out.reshape(N, C, W, H)


def init_params(key, C, W, H, heads):
    dh = C // heads
    ks = jax.random.split(key, 8)
    scale = 1.0 / jnp.sqrt(C)
    return {
        "wq": (jax.random.normal(ks[0], (C, C), jnp.float32) * scale),
        "bq": (jax.random.normal(ks[1], (C,), jnp.float32) * scale),
        "wk": (jax.random.normal(ks[2], (C, C), jnp.float32) * scale),
        "bk": (jax.random.normal(ks[3], (C,), jnp.float32) * scale),
        "wv": (jax.random.normal(ks[4], (C, C), jnp.float32) * scale),
        "bv": (jax.random.normal(ks[5], (C,), jnp.float32) * scale),
        "rel_h": jax.random.normal(ks[6], (1, heads, dh, 1, H), jnp.float32),
        "rel_w": jax.random.normal(ks[7], (1, heads, dh, W, 1), jnp.float32),
    }


if __name__ == "__main__":
    key = jax.random.PRNGKey(0)
    N, C, W, H, heads = 2, 32, 8, 8, 4  # dh = 8, L = 64

    kx, kp = jax.random.split(key)
    x = jax.random.normal(kx, (N, C, W, H), jnp.float32)
    params = init_params(kp, C, W, H, heads)

    out = mhsa_pallas(x, params, heads)
    out = jax.block_until_ready(out)

    ref = mhsa_reference(x, params, heads)
    assert out.shape == (N, C, W, H)
    # Tolerance accounts for the EUP approximate reciprocal in the softmax
    # normalization (outputs are O(1) convex combinations of v columns).
    assert jnp.allclose(out, ref, atol=5e-3, rtol=5e-3), "mismatch vs JAX reference"

    print("KERNEL_OK")
</pallas_src>

<mosaic_0001>
module attributes {stable_mosaic.version = 11 : i64} {
  func.func @_mhsa_kernel(%arg0: i32, %arg1: memref<1x32x64xf32, #tpu.memory_space<vmem>>, %arg2: memref<96x32xf32, #tpu.memory_space<vmem>>, %arg3: memref<96x1xf32, #tpu.memory_space<vmem>>, %arg4: memref<4x8x64xf32, #tpu.memory_space<vmem>>, %arg5: memref<1x8x256xf32, #tpu.memory_space<vmem>>) attributes {dimension_semantics = [#tpu.dimension_semantics<parallel>], iteration_bounds = array<i64: 2>, scalar_prefetch = 0 : i64, scratch_operands = 0 : i64, tpu.core_type = #tpu.core_type<tc>, window_params = [{transform_indices = @transform_0, window_bounds = array<i64: 1, 32, 64>}, {pipeline_mode = #tpu.pipeline_mode<synchronous>, transform_indices = @transform_1, window_bounds = array<i64: 96, 32>}, {pipeline_mode = #tpu.pipeline_mode<synchronous>, transform_indices = @transform_2, window_bounds = array<i64: 96, 1>}, {pipeline_mode = #tpu.pipeline_mode<synchronous>, transform_indices = @transform_3, window_bounds = array<i64: 4, 8, 64>}, {transform_indices = @transform_4, window_bounds = array<i64: 1, 8, 256>}]} {
    %c0 = arith.constant 0 : index
    %c0_0 = arith.constant 0 : index
    %c0_1 = arith.constant 0 : index
    %0 = vector.load %arg1[%c0, %c0_0, %c0_1] : memref<1x32x64xf32, #tpu.memory_space<vmem>>, vector<1x32x64xf32>
    %1 = vector.shape_cast %0 : vector<1x32x64xf32> to vector<32x64xf32>
    %c0_2 = arith.constant 0 : index
    %c0_3 = arith.constant 0 : index
    %2 = vector.load %arg2[%c0_2, %c0_3] : memref<96x32xf32, #tpu.memory_space<vmem>>, vector<96x32xf32>
    %cst = arith.constant dense<0.000000e+00> : vector<96x64xf32>
    %3 = tpu.matmul %2, %1, %cst {dimension_numbers = #tpu.dot_dimension_numbers<[1], [0], [0], [1], [0, 0, 1, 1], [], []>} : vector<96x32xf32>, vector<32x64xf32>, vector<96x64xf32> -> vector<96x64xf32>
    %c0_4 = arith.constant 0 : index
    %c0_5 = arith.constant 0 : index
    %4 = vector.load %arg3[%c0_4, %c0_5] : memref<96x1xf32, #tpu.memory_space<vmem>>, vector<96x1xf32>
    %5 = vector.broadcast %4 : vector<96x1xf32> to vector<96x64xf32>
    %6 = arith.addf %3, %5 : vector<96x64xf32>
    %7 = vector.extract_strided_slice %6 {offsets = [0, 0], sizes = [8, 64], strides = [1, 1]} : vector<96x64xf32> to vector<8x64xf32>
    %8 = vector.extract_strided_slice %6 {offsets = [32, 0], sizes = [8, 64], strides = [1, 1]} : vector<96x64xf32> to vector<8x64xf32>
    %9 = vector.extract_strided_slice %6 {offsets = [64, 0], sizes = [8, 64], strides = [1, 1]} : vector<96x64xf32> to vector<8x64xf32>
    %c0_6 = arith.constant 0 : index
    %c0_7 = arith.constant 0 : index
    %c0_8 = arith.constant 0 : index
    %10 = vector.load %arg4[%c0_6, %c0_7, %c0_8] : memref<4x8x64xf32, #tpu.memory_space<vmem>>, vector<1x8x64xf32>
    %11 = vector.shape_cast %10 : vector<1x8x64xf32> to vector<8x64xf32>
    %cst_9 = arith.constant dense<0.000000e+00> : vector<64x64xf32>
    %12 = tpu.matmul %7, %8, %cst_9 {dimension_numbers = #tpu.dot_dimension_numbers<[0], [0], [1], [1], [0, 1, 1, 1], [], []>} : vector<8x64xf32>, vector<8x64xf32>, vector<64x64xf32> -> vector<64x64xf32>
    %cst_10 = arith.constant dense<0.000000e+00> : vector<64x64xf32>
    %13 = tpu.matmul %11, %7, %cst_10 {dimension_numbers = #tpu.dot_dimension_numbers<[0], [0], [1], [1], [0, 1, 1, 1], [], []>} : vector<8x64xf32>, vector<8x64xf32>, vector<64x64xf32> -> vector<64x64xf32>
    %14 = arith.addf %12, %13 : vector<64x64xf32>
    %cst_11 = arith.constant dense<0xFF800000> : vector<64xf32>
    %15 = vector.multi_reduction <maximumf>, %14, %cst_11 [1] : vector<64x64xf32> to vector<64xf32>
    %16 = vector.shape_cast %15 : vector<64xf32> to vector<64x1xf32>
    %17 = vector.broadcast %16 : vector<64x1xf32> to vector<64x64xf32>
    %18 = arith.subf %14, %17 : vector<64x64xf32>
    %19 = math.exp %18 : vector<64x64xf32>
    %cst_12 = arith.constant dense<0.000000e+00> : vector<64xf32>
    %20 = vector.multi_reduction <add>, %19, %cst_12 [1] : vector<64x64xf32> to vector<64xf32>
    %21 = vector.shape_cast %20 : vector<64xf32> to vector<64x1xf32>
    %22 = tpu.reciprocal %21 {approx = true} : vector<64x1xf32> -> vector<64x1xf32>
    %23 = vector.broadcast %22 : vector<64x1xf32> to vector<64x64xf32>
    %24 = arith.mulf %19, %23 : vector<64x64xf32>
    %cst_13 = arith.constant dense<0.000000e+00> : vector<8x64xf32>
    %25 = tpu.matmul %9, %24, %cst_13 {dimension_numbers = #tpu.dot_dimension_numbers<[1], [1], [0], [0], [0, 0, 1, 0], [], []>} : vector<8x64xf32>, vector<64x64xf32>, vector<8x64xf32> -> vector<8x64xf32>
    %26 = vector.extract_strided_slice %6 {offsets = [8, 0], sizes = [8, 64], strides = [1, 1]} : vector<96x64xf32> to vector<8x64xf32>
    %27 = vector.extract_strided_slice %6 {offsets = [40, 0], sizes = [8, 64], strides = [1, 1]} : vector<96x64xf32> to vector<8x64xf32>
    %28 = vector.extract_strided_slice %6 {offsets = [72, 0], sizes = [8, 64], strides = [1, 1]} : vector<96x64xf32> to vector<8x64xf32>
    %c1 = arith.constant 1 : index
    %c0_14 = arith.constant 0 : index
    %c0_15 = arith.constant 0 : index
    %29 = vector.load %arg4[%c1, %c0_14, %c0_15] : memref<4x8x64xf32, #tpu.memory_space<vmem>>, vector<1x8x64xf32>
    %30 = vector.shape_cast %29 : vector<1x8x64xf32> to vector<8x64xf32>
    %cst_16 = arith.constant dense<0.000000e+00> : vector<64x64xf32>
    %31 = tpu.matmul %26, %27, %cst_16 {dimension_numbers = #tpu.dot_dimension_numbers<[0], [0], [1], [1], [0, 1, 1, 1], [], []>} : vector<8x64xf32>, vector<8x64xf32>, vector<64x64xf32> -> vector<64x64xf32>
    %cst_17 = arith.constant dense<0.000000e+00> : vector<64x64xf32>
    %32 = tpu.matmul %30, %26, %cst_17 {dimension_numbers = #tpu.dot_dimension_numbers<[0], [0], [1], [1], [0, 1, 1, 1], [], []>} : vector<8x64xf32>, vector<8x64xf32>, vector<64x64xf32> -> vector<64x64xf32>
    %33 = arith.addf %31, %32 : vector<64x64xf32>
    %cst_18 = arith.constant dense<0xFF800000> : vector<64xf32>
    %34 = vector.multi_reduction <maximumf>, %33, %cst_18 [1] : vector<64x64xf32> to vector<64xf32>
    %35 = vector.shape_cast %34 : vector<64xf32> to vector<64x1xf32>
    %36 = vector.broadcast %35 : vector<64x1xf32> to vector<64x64xf32>
    %37 = arith.subf %33, %36 : vector<64x64xf32>
    %38 = math.exp %37 : vector<64x64xf32>
    %cst_19 = arith.constant dense<0.000000e+00> : vector<64xf32>
    %39 = vector.multi_reduction <add>, %38, %cst_19 [1] : vector<64x64xf32> to vector<64xf32>
    %40 = vector.shape_cast %39 : vector<64xf32> to vector<64x1xf32>
    %41 = tpu.reciprocal %40 {approx = true} : vector<64x1xf32> -> vector<64x1xf32>
    %42 = vector.broadcast %41 : vector<64x1xf32> to vector<64x64xf32>
    %43 = arith.mulf %38, %42 : vector<64x64xf32>
    %cst_20 = arith.constant dense<0.000000e+00> : vector<8x64xf32>
    %44 = tpu.matmul %28, %43, %cst_20 {dimension_numbers = #tpu.dot_dimension_numbers<[1], [1], [0], [0], [0, 0, 1, 0], [], []>} : vector<8x64xf32>, vector<64x64xf32>, vector<8x64xf32> -> vector<8x64xf32>
    %45 = vector.extract_strided_slice %6 {offsets = [16, 0], sizes = [8, 64], strides = [1, 1]} : vector<96x64xf32> to vector<8x64xf32>
    %46 = vector.extract_strided_slice %6 {offsets = [48, 0], sizes = [8, 64], strides = [1, 1]} : vector<96x64xf32> to vector<8x64xf32>
    %47 = vector.extract_strided_slice %6 {offsets = [80, 0], sizes = [8, 64], strides = [1, 1]} : vector<96x64xf32> to vector<8x64xf32>
    %c2 = arith.constant 2 : index
    %c0_21 = arith.constant 0 : index
    %c0_22 = arith.constant 0 : index
    %48 = vector.load %arg4[%c2, %c0_21, %c0_22] : memref<4x8x64xf32, #tpu.memory_space<vmem>>, vector<1x8x64xf32>
    %49 = vector.shape_cast %48 : vector<1x8x64xf32> to vector<8x64xf32>
    %cst_23 = arith.constant dense<0.000000e+00> : vector<64x64xf32>
    %50 = tpu.matmul %45, %46, %cst_23 {dimension_numbers = #tpu.dot_dimension_numbers<[0], [0], [1], [1], [0, 1, 1, 1], [], []>} : vector<8x64xf32>, vector<8x64xf32>, vector<64x64xf32> -> vector<64x64xf32>
    %cst_24 = arith.constant dense<0.000000e+00> : vector<64x64xf32>
    %51 = tpu.matmul %49, %45, %cst_24 {dimension_numbers = #tpu.dot_dimension_numbers<[0], [0], [1], [1], [0, 1, 1, 1], [], []>} : vector<8x64xf32>, vector<8x64xf32>, vector<64x64xf32> -> vector<64x64xf32>
    %52 = arith.addf %50, %51 : vector<64x64xf32>
    %cst_25 = arith.constant dense<0xFF800000> : vector<64xf32>
    %53 = vector.multi_reduction <maximumf>, %52, %cst_25 [1] : vector<64x64xf32> to vector<64xf32>
    %54 = vector.shape_cast %53 : vector<64xf32> to vector<64x1xf32>
    %55 = vector.broadcast %54 : vector<64x1xf32> to vector<64x64xf32>
    %56 = arith.subf %52, %55 : vector<64x64xf32>
    %57 = math.exp %56 : vector<64x64xf32>
    %cst_26 = arith.constant dense<0.000000e+00> : vector<64xf32>
    %58 = vector.multi_reduction <add>, %57, %cst_26 [1] : vector<64x64xf32> to vector<64xf32>
    %59 = vector.shape_cast %58 : vector<64xf32> to vector<64x1xf32>
    %60 = tpu.reciprocal %59 {approx = true} : vector<64x1xf32> -> vector<64x1xf32>
    %61 = vector.broadcast %60 : vector<64x1xf32> to vector<64x64xf32>
    %62 = arith.mulf %57, %61 : vector<64x64xf32>
    %cst_27 = arith.constant dense<0.000000e+00> : vector<8x64xf32>
    %63 = tpu.matmul %47, %62, %cst_27 {dimension_numbers = #tpu.dot_dimension_numbers<[1], [1], [0], [0], [0, 0, 1, 0], [], []>} : vector<8x64xf32>, vector<64x64xf32>, vector<8x64xf32> -> vector<8x64xf32>
    %64 = vector.extract_strided_slice %6 {offsets = [24, 0], sizes = [8, 64], strides = [1, 1]} : vector<96x64xf32> to vector<8x64xf32>
    %65 = vector.extract_strided_slice %6 {offsets = [56, 0], sizes = [8, 64], strides = [1, 1]} : vector<96x64xf32> to vector<8x64xf32>
    %66 = vector.extract_strided_slice %6 {offsets = [88, 0], sizes = [8, 64], strides = [1, 1]} : vector<96x64xf32> to vector<8x64xf32>
    %c3 = arith.constant 3 : index
    %c0_28 = arith.constant 0 : index
    %c0_29 = arith.constant 0 : index
    %67 = vector.load %arg4[%c3, %c0_28, %c0_29] : memref<4x8x64xf32, #tpu.memory_space<vmem>>, vector<1x8x64xf32>
    %68 = vector.shape_cast %67 : vector<1x8x64xf32> to vector<8x64xf32>
    %cst_30 = arith.constant dense<0.000000e+00> : vector<64x64xf32>
    %69 = tpu.matmul %64, %65, %cst_30 {dimension_numbers = #tpu.dot_dimension_numbers<[0], [0], [1], [1], [0, 1, 1, 1], [], []>} : vector<8x64xf32>, vector<8x64xf32>, vector<64x64xf32> -> vector<64x64xf32>
    %cst_31 = arith.constant dense<0.000000e+00> : vector<64x64xf32>
    %70 = tpu.matmul %68, %64, %cst_31 {dimension_numbers = #tpu.dot_dimension_numbers<[0], [0], [1], [1], [0, 1, 1, 1], [], []>} : vector<8x64xf32>, vector<8x64xf32>, vector<64x64xf32> -> vector<64x64xf32>
    %71 = arith.addf %69, %70 : vector<64x64xf32>
    %cst_32 = arith.constant dense<0xFF800000> : vector<64xf32>
    %72 = vector.multi_reduction <maximumf>, %71, %cst_32 [1] : vector<64x64xf32> to vector<64xf32>
    %73 = vector.shape_cast %72 : vector<64xf32> to vector<64x1xf32>
    %74 = vector.broadcast %73 : vector<64x1xf32> to vector<64x64xf32>
    %75 = arith.subf %71, %74 : vector<64x64xf32>
    %76 = math.exp %75 : vector<64x64xf32>
    %cst_33 = arith.constant dense<0.000000e+00> : vector<64xf32>
    %77 = vector.multi_reduction <add>, %76, %cst_33 [1] : vector<64x64xf32> to vector<64xf32>
    %78 = vector.shape_cast %77 : vector<64xf32> to vector<64x1xf32>
    %79 = tpu.reciprocal %78 {approx = true} : vector<64x1xf32> -> vector<64x1xf32>
    %80 = vector.broadcast %79 : vector<64x1xf32> to vector<64x64xf32>
    %81 = arith.mulf %76, %80 : vector<64x64xf32>
    %cst_34 = arith.constant dense<0.000000e+00> : vector<8x64xf32>
    %82 = tpu.matmul %66, %81, %cst_34 {dimension_numbers = #tpu.dot_dimension_numbers<[1], [1], [0], [0], [0, 0, 1, 0], [], []>} : vector<8x64xf32>, vector<64x64xf32>, vector<8x64xf32> -> vector<8x64xf32>
    %83 = tpu.concatenate %25, %44, %63, %82 in 1 : vector<8x64xf32>, vector<8x64xf32>, vector<8x64xf32>, vector<8x64xf32> -> vector<8x256xf32>
    %c0_35 = arith.constant 0 : index
    %c0_36 = arith.constant 0 : index
    %c0_37 = arith.constant 0 : index
    %84 = vector.load %arg5[%c0_35, %c0_36, %c0_37] : memref<1x8x256xf32, #tpu.memory_space<vmem>>, vector<1x8x256xf32>
    %85 = vector.shape_cast %84 : vector<1x8x256xf32> to vector<8x256xf32>
    %86 = vector.shape_cast %83 : vector<8x256xf32> to vector<1x8x256xf32>
    tpu.vector_store %arg5[%c0_35, %c0_36, %c0_37], %86 {strides = array<i32>} : memref<1x8x256xf32, #tpu.memory_space<vmem>>, vector<1x8x256xf32>,
    return
  }
  func.func @transform_0(%arg0: i32) -> (i32, i32, i32) {
    %c0_i32 = arith.constant 0 : i32
    %c0_i32_0 = arith.constant 0 : i32
    %c0_i32_1 = arith.constant 0 : i32
    return %arg0, %c0_i32, %c0_i32_0 : i32, i32, i32
  }
  func.func @transform_1(%arg0: i32) -> (i32, i32) {
    %c0_i32 = arith.constant 0 : i32
    %c0_i32_0 = arith.constant 0 : i32
    %c0_i32_1 = arith.constant 0 : i32
    return %c0_i32, %c0_i32_0 : i32, i32
  }
  func.func @transform_2(%arg0: i32) -> (i32, i32) {
    %c0_i32 = arith.constant 0 : i32
    %c0_i32_0 = arith.constant 0 : i32
    %c0_i32_1 = arith.constant 0 : i32
    return %c0_i32, %c0_i32_0 : i32, i32
  }
  func.func @transform_3(%arg0: i32) -> (i32, i32, i32) {
    %c0_i32 = arith.constant 0 : i32
    %c0_i32_0 = arith.constant 0 : i32
    %c0_i32_1 = arith.constant 0 : i32
    %c0_i32_2 = arith.constant 0 : i32
    return %c0_i32, %c0_i32_0, %c0_i32_1 : i32, i32, i32
  }
  func.func @transform_4(%arg0: i32) -> (i32, i32, i32) {
    %c0_i32 = arith.constant 0 : i32
    %c0_i32_0 = arith.constant 0 : i32
    %c0_i32_1 = arith.constant 0 : i32
    return %arg0, %c0_i32, %c0_i32_0 : i32, i32, i32
  }
}

</mosaic_0001>

<llo_original>
// kernel: tpu_custom_call.1
$region0: #{tpu_custom_call.1}
  #allocation0 [shape = 'u32[]', space=smem, size = 0x4, offset = 0x4, fixed_abs, tag = 'smem constant byte address 0x4 - core index']
  #allocation1 [shape = 'u32[72,128]{1,0:T(1,128)}', space=vmem, size = 0x9000, scoped, tag = 'internal scratch']
  %s0 = inlined_call_operand.vmem [shape: f32[2,32,64], index: 0, kind: input, shape index: {}]
  %s1 = inlined_call_operand.vmem [shape: f32[96,32], index: 1, kind: input, shape index: {}]
  %s2 = inlined_call_operand.vmem [shape: f32[96,1], index: 2, kind: input, shape index: {}]
  %s3 = inlined_call_operand.vmem [shape: f32[4,8,64], index: 3, kind: input, shape index: {}]
  %s4 = inlined_call_operand.hbm [shape: f32[2,8,256], index: 4, kind: output, shape index: {}]
  %s5 = sld [smem:[#allocation0]]
  $region49: #{tpu_custom_call.1} parent=0
    _
  %s7 = ssub.s32 1, %s5
  %s8 = scalar_select 0, %s7, %s5
  $region1: #{tpu_custom_call.1} parent=0
    #allocation2 [shape = 'u8[16384]{0}', space=vmem, size = 0x4000, scoped, tag = 'output window, operand 0']
    #allocation3 [shape = 's32[2]{0}', space=sflag, size = 0x8, scoped, tag = 'scoped memory for tpu_custom_call.1']
    %9 = vsyncpa [#allocation3], 0
    %s10 = scalar_lea.sflag [#allocation3], 1
    %11 = vsyncpa %s10, 0
    loop: start=0, step=1, limit=4
    $region2: #{tpu_custom_call.1} parent=1 // loop_pre_header
      _
    $region3: #{tpu_custom_call.1} parent=1 // loop_header
      %s13 = sphi 0, %s17
      %p14 = scmp.ge.s32.totalorder %s13, 4
      %s23 = sphi 0, %s25
      %s26 = sphi 0, %s23
      %s27 = sphi 0, %s26
      %s43 = sphi 0, %s27
      %s47 = sphi 0, %s47
      %s49 = sphi 0, %s47
      %s50 = sphi 0, %s49
      %s64 = sphi 0, %s50
      %s68 = sphi 0, %s68
      %s70 = sphi 0, %s68
      %s71 = sphi 0, %s70
      %s85 = sphi 0, %s71
      %s89 = sphi 0, %s89
      %s91 = sphi 0, %s89
      %s92 = sphi 0, %s91
      %s106 = sphi 0, %s92
      %s112 = sphi 0, %s114
      %s115 = sphi 0, %s112
      %s116 = sphi 0, %s115
      %s132 = sphi 0, %s116
    $region4: #{tpu_custom_call.1} parent=1 // loop_header_branch
      %16 = sbr.rel (%p14) target = $region8
    $region5: #{tpu_custom_call.1} parent=1 // loop_body
      %s18 = ssub.s32 %s13, 1
      %s19 = ssub.s32 %s13, 2
      %s20 = sadd.s32 %s13, 1
      %s21 = ssub.s32 %s13, %s20
      %p22 = scmp.eq.s32.totalorder %s21, 0
      %s24 = sadd.s32 %s23, 1
      %s25 = scalar_select %p22, %s23, %s24
      %p28 = pneg %p22
      %p29 = scmp.eq.s32.totalorder %s13, 1
      %p30 = por %p28, %p29
      %p31 = scmp.ne.s32.totalorder %s23, %s26
      %p32 = scmp.eq.s32.totalorder %s13, 0
      %p33 = por %p31, %p32
      %p34 = scmp.ne.s32.totalorder %s23, %s26
      %p35 = scmp.eq.s32.totalorder %s18, 1
      %p36 = por %p34, %p35
      %p37 = scmp.ne.s32.totalorder %s26, %s27
      %p38 = scmp.eq.s32.totalorder %s18, 0
      %p39 = por %p37, %p38
      %p40 = scmp.ne.s32.totalorder %s26, %s27
      %p41 = scmp.eq.s32.totalorder %s19, 1
      %p42 = por %p40, %p41
      %p44 = scmp.ne.s32.totalorder %s27, %s43
      %p45 = scmp.eq.s32.totalorder %s19, 0
      %p46 = por %p44, %p45
      %s48 = sadd.s32 %s47, 1
      %p51 = scmp.eq.s32.totalorder %s13, 1
      %p52 = scmp.ne.s32.totalorder %s47, %s49
      %p53 = scmp.eq.s32.totalorder %s13, 0
      %p54 = por %p52, %p53
      %p55 = scmp.ne.s32.totalorder %s47, %s49
      %p56 = scmp.eq.s32.totalorder %s18, 1
      %p57 = por %p55, %p56
      %p58 = scmp.ne.s32.totalorder %s49, %s50
      %p59 = scmp.eq.s32.totalorder %s18, 0
      %p60 = por %p58, %p59
      %p61 = scmp.ne.s32.totalorder %s49, %s50
      %p62 = scmp.eq.s32.totalorder %s19, 1
      %p63 = por %p61, %p62
      %p65 = scmp.ne.s32.totalorder %s50, %s64
      %p66 = scmp.eq.s32.totalorder %s19, 0
      %p67 = por %p65, %p66
      %s69 = sadd.s32 %s68, 1
      %p72 = scmp.eq.s32.totalorder %s13, 1
      %p73 = scmp.ne.s32.totalorder %s68, %s70
      %p74 = scmp.eq.s32.totalorder %s13, 0
      %p75 = por %p73, %p74
      %p76 = scmp.ne.s32.totalorder %s68, %s70
      %p77 = scmp.eq.s32.totalorder %s18, 1
      %p78 = por %p76, %p77
      %p79 = scmp.ne.s32.totalorder %s70, %s71
      %p80 = scmp.eq.s32.totalorder %s18, 0
      %p81 = por %p79, %p80
      %p82 = scmp.ne.s32.totalorder %s70, %s71
      %p83 = scmp.eq.s32.totalorder %s19, 1
      %p84 = por %p82, %p83
      %p86 = scmp.ne.s32.totalorder %s71, %s85
      %p87 = scmp.eq.s32.totalorder %s19, 0
      %p88 = por %p86, %p87
      %s90 = sadd.s32 %s89, 1
      %p93 = scmp.eq.s32.totalorder %s13, 1
      %p94 = scmp.ne.s32.totalorder %s89, %s91
      %p95 = scmp.eq.s32.totalorder %s13, 0
      %p96 = por %p94, %p95
      %p97 = scmp.ne.s32.totalorder %s89, %s91
      %p98 = scmp.eq.s32.totalorder %s18, 1
      %p99 = por %p97, %p98
      %p100 = scmp.ne.s32.totalorder %s91, %s92
      %p101 = scmp.eq.s32.totalorder %s18, 0
      %p102 = por %p100, %p101
      %p103 = scmp.ne.s32.totalorder %s91, %s92
      %p104 = scmp.eq.s32.totalorder %s19, 1
      %p105 = por %p103, %p104
      %p107 = scmp.ne.s32.totalorder %s92, %s106
      %p108 = scmp.eq.s32.totalorder %s19, 0
      %p109 = por %p107, %p108
      %s110 = ssub.s32 %s13, %s20
      %p111 = scmp.eq.s32.totalorder %s110, 0
      %s113 = sadd.s32 %s112, 1
      %s114 = scalar_select %p111, %s112, %s113
      %p117 = pneg %p111
      %p118 = scmp.eq.s32.totalorder %s13, 1
      %p119 = por %p117, %p118
      %p120 = scmp.ne.s32.totalorder %s112, %s115
      %p121 = scmp.eq.s32.totalorder %s13, 0
      %p122 = por %p120, %p121
      %p123 = scmp.ne.s32.totalorder %s112, %s115
      %p124 = scmp.eq.s32.totalorder %s18, 1
      %p125 = por %p123, %p124
      %p126 = scmp.ne.s32.totalorder %s115, %s116
      %p127 = scmp.eq.s32.totalorder %s18, 0
      %p128 = por %p126, %p127
      %p129 = scmp.ne.s32.totalorder %s115, %s116
      %p130 = scmp.eq.s32.totalorder %s19, 1
      %p131 = por %p129, %p130
      %p133 = scmp.ne.s32.totalorder %s116, %s132
      %p134 = scmp.eq.s32.totalorder %s19, 0
      %p135 = por %p133, %p134
      %p136 = scmp.le.s32.totalorder 1, %s13
      %p137 = scmp.lt.s32.totalorder %s13, 3
      %p138 = pnand %p136, %p137
      %p139 = pneg %p138
      // Predicated region
      $region9: #{tpu_custom_call.1} parent=5 // pred_check
        _
      $region10: #{tpu_custom_call.1} parent=5 // pred_check_branch
        %141 = sbr.rel (%p138) target = $region12
      $region11: #{tpu_custom_call.1} parent=5 // pred_region
        %s142 = ssub.s32 %s13, 1
        // Predicated region
        $region13: #{tpu_custom_call.1} parent=11 // pred_check
          %p143 = pneg %p60
        $region14: #{tpu_custom_call.1} parent=11 // pred_check_branch
          %145 = sbr.rel (%p143) target = $region16
        $region15: #{tpu_custom_call.1} parent=11 // pred_region
          _
        $region16: #{tpu_custom_call.1} parent=11 // pred_fallthru
          _
        // Predicated region
        $region17: #{tpu_custom_call.1} parent=11 // pred_check
          %p146 = pneg %p81
        $region18: #{tpu_custom_call.1} parent=11 // pred_check_branch
          %148 = sbr.rel (%p146) target = $region20
        $region19: #{tpu_custom_call.1} parent=11 // pred_region
          _
        $region20: #{tpu_custom_call.1} parent=11 // pred_fallthru
          _
        // Predicated region
        $region21: #{tpu_custom_call.1} parent=11 // pred_check
          %p149 = pneg %p102
        $region22: #{tpu_custom_call.1} parent=11 // pred_check_branch
          %151 = sbr.rel (%p149) target = $region24
        $region23: #{tpu_custom_call.1} parent=11 // pred_region
          _
        $region24: #{tpu_custom_call.1} parent=11 // pred_fallthru
          _
      $region12: #{tpu_custom_call.1} parent=5 // pred_fallthru
        _
      %p152 = scmp.lt.s32.totalorder %s13, 2
      // Predicated region
      $region25: #{tpu_custom_call.1} parent=5 // pred_check
        %p153 = pneg %p152
      $region26: #{tpu_custom_call.1} parent=5 // pred_check_branch
        %155 = sbr.rel (%p153) target = $region28
      $region27: #{tpu_custom_call.1} parent=5 // pred_region
        // Predicated region
        $region29: #{tpu_custom_call.1} parent=27 // pred_check
          %p156 = pneg %p33
        $region30: #{tpu_custom_call.1} parent=27 // pred_check_branch
          %158 = sbr.rel (%p156) target = $region32
        $region31: #{tpu_custom_call.1} parent=27 // pred_region
          %p159 = scmp.lt.s32.totalorder %s13, 1
          %s160 = scalar_select %p159, %s13, 1
          %s161 = smul.addr %s160, 4
          %s162 = smul.addr %s161, 8
          %s163 = scalar_lea.vmem %s0, %s162
        $region32: #{tpu_custom_call.1} parent=27 // pred_fallthru
          _
      $region28: #{tpu_custom_call.1} parent=5 // pred_fallthru
        _
      %p164 = scmp.le.s32.totalorder 1, %s13
      %p165 = scmp.lt.s32.totalorder %s13, 3
      %p166 = pnand %p164, %p165
      %p167 = pneg %p166
      // Predicated region
      $region33: #{tpu_custom_call.1} parent=5 // pred_check
        _
      $region34: #{tpu_custom_call.1} parent=5 // pred_check_branch
        %169 = sbr.rel (%p166) target = $region36
      $region35: #{tpu_custom_call.1} parent=5 // pred_region
        %s170 = ssub.s32 %s13, 1
        %p171 = scmp.lt.s32.totalorder %s18, 1
        %s172 = scalar_select %p171, %s18, 1
        %s173 = smul.addr %s172, 4
        %s174 = smul.addr %s173, 8
        %s175 = scalar_lea.vmem %s0, %s174
        %p176 = pneg %p39
        %p177 = pneg %p36
        %p178 = pneg %p60
        %p179 = pneg %p57
        %p180 = pneg %p81
        %p181 = pneg %p78
        %p182 = pneg %p102
        %p183 = pneg %p99
        %p184 = pneg %p128
        %p185 = pneg %p125
        %s186 = sand.u32 %s115, 1
        %s187 = scalar_lea.sflag [#allocation3], %s186
        %s188 = sand.u32 %s115, 1
        %s189 = smul.addr %s188, 16
        %s190 = scalar_lea.vmem [#allocation2], %s189
        %p191 = scmp.lt.s32.totalorder %s18, 1
        %s192 = scalar_select %p191, %s18, 1
        %s193 = smul.addr %s192, 4
        %s194 = smul.addr %s193, 8
        %s195 = scalar_lea.vmem %s0, %s194
        %v196 = vld [vmem:[%s195] sm:$0xff]
        %v197 = vld [vmem:[%s195 + $0x8] sm:$0xff]
        %v198 = vld [vmem:[%s195 + $0x10] sm:$0xff]
        %v199 = vld [vmem:[%s195 + $0x18] sm:$0xff]
        %v200 = vld [vmem:[%s1] sm:$0xff]
        %v201 = vld [vmem:[%s1 + $0x8] sm:$0xff]
        %v202 = vld [vmem:[%s1 + $0x10] sm:$0xff]
        %v203 = vld [vmem:[%s1 + $0x18] sm:$0xff]
        %v204 = vld [vmem:[%s1 + $0x20] sm:$0xff]
        %v205 = vld [vmem:[%s1 + $0x28] sm:$0xff]
        %v206 = vld [vmem:[%s1 + $0x30] sm:$0xff]
        %v207 = vld [vmem:[%s1 + $0x38] sm:$0xff]
        %v208 = vld [vmem:[%s1 + $0x40] sm:$0xff]
        %v209 = vld [vmem:[%s1 + $0x48] sm:$0xff]
        %v210 = vld [vmem:[%s1 + $0x50] sm:$0xff]
        %v211 = vld [vmem:[%s1 + $0x58] sm:$0xff]
        %v212 = vld [vmem:[%s2] sm:$0xff]
        %v213 = vld [vmem:[%s2 + $0x8] sm:$0xff]
        %v214 = vld [vmem:[%s2 + $0x10] sm:$0xff]
        %v215 = vld [vmem:[%s2 + $0x18] sm:$0xff]
        %v216 = vld [vmem:[%s2 + $0x20] sm:$0xff]
        %v217 = vld [vmem:[%s2 + $0x28] sm:$0xff]
        %v218 = vld [vmem:[%s2 + $0x30] sm:$0xff]
        %v219 = vld [vmem:[%s2 + $0x38] sm:$0xff]
        %v220 = vld [vmem:[%s2 + $0x40] sm:$0xff]
        %v221 = vld [vmem:[%s2 + $0x48] sm:$0xff]
        %v222 = vld [vmem:[%s2 + $0x50] sm:$0xff]
        %v223 = vld [vmem:[%s2 + $0x58] sm:$0xff]
        %225 = vset.pattern.permute.xlu0 0
        %226 = vperm.xlu0 %225, %v212
        %v227 = vpop.permute.xlu0 %226
        %230 = vset.pattern.permute.xlu0 0
        %231 = vperm.xlu0 %230, %v213
        %v232 = vpop.permute.xlu0 %231
        %235 = vset.pattern.permute.xlu0 0
        %236 = vperm.xlu0 %235, %v214
        %v237 = vpop.permute.xlu0 %236
        %240 = vset.pattern.permute.xlu0 0
        %241 = vperm.xlu0 %240, %v215
        %v242 = vpop.permute.xlu0 %241
        %245 = vset.pattern.permute.xlu0 0
        %246 = vperm.xlu0 %245, %v216
        %v247 = vpop.permute.xlu0 %246
        %250 = vset.pattern.permute.xlu0 0
        %251 = vperm.xlu0 %250, %v217
        %v252 = vpop.permute.xlu0 %251
        %255 = vset.pattern.permute.xlu0 0
        %256 = vperm.xlu0 %255, %v218
        %v257 = vpop.permute.xlu0 %256
        %260 = vset.pattern.permute.xlu0 0
        %261 = vperm.xlu0 %260, %v219
        %v262 = vpop.permute.xlu0 %261
        %265 = vset.pattern.permute.xlu0 0
        %266 = vperm.xlu0 %265, %v220
        %v267 = vpop.permute.xlu0 %266
        %270 = vset.pattern.permute.xlu0 0
        %271 = vperm.xlu0 %270, %v221
        %v272 = vpop.permute.xlu0 %271
        %275 = vset.pattern.permute.xlu0 0
        %276 = vperm.xlu0 %275, %v222
        %v277 = vpop.permute.xlu0 %276
        %280 = vset.pattern.permute.xlu0 0
        %281 = vperm.xlu0 %280, %v223
        %v282 = vpop.permute.xlu0 %281
        %vm284 = vcmask 261120
        %v286 = vsel %vm284, %v200, 0
        %v289 = vsel %vm284, %v201, 0
        %v292 = vsel %vm284, %v202, 0
        %v295 = vsel %vm284, %v203, 0
        %v298 = vsel %vm284, %v204, 0
        %v301 = vsel %vm284, %v205, 0
        %v304 = vsel %vm284, %v206, 0
        %v307 = vsel %vm284, %v207, 0
        %v310 = vsel %vm284, %v208, 0
        %v313 = vsel %vm284, %v209, 0
        %v316 = vsel %vm284, %v210, 0
        %v319 = vsel %vm284, %v211, 0
        %321 = vmatpush.msra.mxu0 0.0
        %322 = vmatpush.msra.mxu0 0.0
        %323 = vmatpush.msra.mxu0 0.0
        %324 = vmatpush.msra.mxu0 0.0
        %325 = vmatpush.msra.mxu0 0.0
        %326 = vmatpush.msra.mxu0 0.0
        %327 = vmatpush.msra.mxu0 0.0
        %328 = vmatpush.msra.mxu0 0.0
        %329 = vmatpush.msra.mxu0 0.0
        %330 = vmatpush.msra.mxu0 0.0
        %331 = vmatpush.msra.mxu0 0.0
        %332 = vmatpush.msra.mxu0 0.0
        %333 = vmatpush.msra.mxu0 %v199
        %334 = vmatpush.msra.mxu0 %v198
        %335 = vmatpush.msra.mxu0 %v197
        %336 = vmatpush.msra.mxu0 %v196
        %337 = vmatmul.f32.gmra.mxu0 %v286
        %v338 = vpop.f32.mrf.mxu0
        %v339 = vadd.f32 %v227, %v338
        %340 = vmatmul.f32.gmra.mxu0 %v289
        %v341 = vpop.f32.mrf.mxu0
        %v342 = vadd.f32 %v232, %v341
        %343 = vmatmul.f32.gmra.mxu0 %v292
        %v344 = vpop.f32.mrf.mxu0
        %v345 = vadd.f32 %v237, %v344
        %346 = vmatmul.f32.gmra.mxu0 %v295
        %v347 = vpop.f32.mrf.mxu0
        %v348 = vadd.f32 %v242, %v347
        %349 = vmatmul.f32.gmra.mxu0 %v298
        %v350 = vpop.f32.mrf.mxu0
        %v351 = vadd.f32 %v247, %v350
        %352 = vmatmul.f32.gmra.mxu0 %v301
        %v353 = vpop.f32.mrf.mxu0
        %v354 = vadd.f32 %v252, %v353
        %355 = vmatmul.f32.gmra.mxu0 %v304
        %v356 = vpop.f32.mrf.mxu0
        %v357 = vadd.f32 %v257, %v356
        %358 = vmatmul.f32.gmra.mxu0 %v307
        %v359 = vpop.f32.mrf.mxu0
        %v360 = vadd.f32 %v262, %v359
        %361 = vmatmul.f32.gmra.mxu0 %v310
        %v362 = vpop.f32.mrf.mxu0
        %v363 = vadd.f32 %v267, %v362
        %364 = vmatmul.f32.gmra.mxu0 %v313
        %v365 = vpop.f32.mrf.mxu0
        %v366 = vadd.f32 %v272, %v365
        %367 = vmatmul.f32.gmra.mxu0 %v316
        %v368 = vpop.f32.mrf.mxu0
        %v369 = vadd.f32 %v277, %v368
        %370 = vmatmul.f32.gmra.mxu0 %v319
        %v371 = vpop.f32.mrf.mxu0
        %v372 = vadd.f32 %v282, %v371
        %373 = vdwg.mxu0
        %v374 = vld [vmem:[%s3] sm:$0xff]
        %375 = vxpose.xlu0.b32.start [1/16] %v374, 128
        %376 = vxpose.xlu0.b32.cont [2/16] 0.0, 128
        %377 = vxpose.xlu0.b32.cont [3/16] 0.0, 128
        %378 = vxpose.xlu0.b32.cont [4/16] 0.0, 128
        %379 = vxpose.xlu0.b32.cont [5/16] 0.0, 128
        %380 = vxpose.xlu0.b32.cont [6/16] 0.0, 128
        %381 = vxpose.xlu0.b32.cont [7/16] 0.0, 128
        %382 = vxpose.xlu0.b32.cont [8/16] 0.0, 128
        %383 = vxpose.xlu0.b32.cont [9/16] 0.0, 128
        %384 = vxpose.xlu0.b32.cont [10/16] 0.0, 128
        %385 = vxpose.xlu0.b32.cont [11/16] 0.0, 128
        %386 = vxpose.xlu0.b32.cont [12/16] 0.0, 128
        %387 = vxpose.xlu0.b32.cont [13/16] 0.0, 128
        %388 = vxpose.xlu0.b32.cont [14/16] 0.0, 128
        %389 = vxpose.xlu0.b32.cont [15/16] 0.0, 128
        %390 = vxpose.xlu0.b32.end [16/16] 0.0, 128
        %v391 = vpop.trf.xlu0
        %v392 = vpop.trf.xlu0
        %v393 = vpop.trf.xlu0
        %v394 = vpop.trf.xlu0
        %v395 = vpop.trf.xlu0
        %v396 = vpop.trf.xlu0
        %v397 = vpop.trf.xlu0
        %v398 = vpop.trf.xlu0
        %v399 = vpop.trf.xlu0
        %v400 = vpop.trf.xlu0
        %v401 = vpop.trf.xlu0
        %v402 = vpop.trf.xlu0
        %v403 = vpop.trf.xlu0
        %v404 = vpop.trf.xlu0
        %v405 = vpop.trf.xlu0
        %v406 = vpop.trf.xlu0
        %vm407 = vcmask 64512
        %v409 = vsel %vm407, %v391, 0
        %v412 = vsel %vm407, %v392, 0
        %v415 = vsel %vm407, %v393, 0
        %v418 = vsel %vm407, %v394, 0
        %v421 = vsel %vm407, %v395, 0
        %v424 = vsel %vm407, %v396, 0
        %v427 = vsel %vm407, %v397, 0
        %v430 = vsel %vm407, %v398, 0
        %432 = vmatpush.msra.mxu0 0.0
        %433 = vmatpush.msra.mxu0 0.0
        %434 = vmatpush.msra.mxu0 0.0
        %435 = vmatpush.msra.mxu0 0.0
        %436 = vmatpush.msra.mxu0 0.0
        %437 = vmatpush.msra.mxu0 0.0
        %438 = vmatpush.msra.mxu0 0.0
        %439 = vmatpush.msra.mxu0 0.0
        %440 = vmatpush.msra.mxu0 0.0
        %441 = vmatpush.msra.mxu0 0.0
        %442 = vmatpush.msra.mxu0 0.0
        %443 = vmatpush.msra.mxu0 0.0
        %444 = vmatpush.msra.mxu0 0.0
        %445 = vmatpush.msra.mxu0 0.0
        %446 = vmatpush.msra.mxu0 0.0
        %447 = vmatpush.msra.mxu0 %v339
        %448 = vmatmul.f32.gmra.mxu0 %v409
        %v449 = vpop.f32.mrf.mxu0
        %v450 = vadd.f32 0.0, %v449
        %451 = vmatmul.f32.gmra.mxu0 %v412
        %v452 = vpop.f32.mrf.mxu0
        %v453 = vadd.f32 0.0, %v452
        %454 = vmatmul.f32.gmra.mxu0 %v415
        %v455 = vpop.f32.mrf.mxu0
        %v456 = vadd.f32 0.0, %v455
        %457 = vmatmul.f32.gmra.mxu0 %v418
        %v458 = vpop.f32.mrf.mxu0
        %v459 = vadd.f32 0.0, %v458
        %460 = vmatmul.f32.gmra.mxu0 %v421
        %v461 = vpop.f32.mrf.mxu0
        %v462 = vadd.f32 0.0, %v461
        %463 = vmatmul.f32.gmra.mxu0 %v424
        %v464 = vpop.f32.mrf.mxu0
        %v465 = vadd.f32 0.0, %v464
        %466 = vmatmul.f32.gmra.mxu0 %v427
        %v467 = vpop.f32.mrf.mxu0
        %v468 = vadd.f32 0.0, %v467
        %469 = vmatmul.f32.gmra.mxu0 %v430
        %v470 = vpop.f32.mrf.mxu0
        %v471 = vadd.f32 0.0, %v470
        %472 = vdwg.mxu0
        %473 = vxpose.xlu0.b32.start [1/16] %v339, 128
        %474 = vxpose.xlu0.b32.cont [2/16] 0.0, 128
        %475 = vxpose.xlu0.b32.cont [3/16] 0.0, 128
        %476 = vxpose.xlu0.b32.cont [4/16] 0.0, 128
        %477 = vxpose.xlu0.b32.cont [5/16] 0.0, 128
        %478 = vxpose.xlu0.b32.cont [6/16] 0.0, 128
        %479 = vxpose.xlu0.b32.cont [7/16] 0.0, 128
        %480 = vxpose.xlu0.b32.cont [8/16] 0.0, 128
        %481 = vxpose.xlu0.b32.cont [9/16] 0.0, 128
        %482 = vxpose.xlu0.b32.cont [10/16] 0.0, 128
        %483 = vxpose.xlu0.b32.cont [11/16] 0.0, 128
        %484 = vxpose.xlu0.b32.cont [12/16] 0.0, 128
        %485 = vxpose.xlu0.b32.cont [13/16] 0.0, 128
        %486 = vxpose.xlu0.b32.cont [14/16] 0.0, 128
        %487 = vxpose.xlu0.b32.cont [15/16] 0.0, 128
        %488 = vxpose.xlu0.b32.end [16/16] 0.0, 128
        %v489 = vpop.trf.xlu0
        %v490 = vpop.trf.xlu0
        %v491 = vpop.trf.xlu0
        %v492 = vpop.trf.xlu0
        %v493 = vpop.trf.xlu0
        %v494 = vpop.trf.xlu0
        %v495 = vpop.trf.xlu0
        %v496 = vpop.trf.xlu0
        %v497 = vpop.trf.xlu0
        %v498 = vpop.trf.xlu0
        %v499 = vpop.trf.xlu0
        %v500 = vpop.trf.xlu0
        %v501 = vpop.trf.xlu0
        %v502 = vpop.trf.xlu0
        %v503 = vpop.trf.xlu0
        %v504 = vpop.trf.xlu0
        %v506 = vsel %vm407, %v489, 0
        %v509 = vsel %vm407, %v490, 0
        %v512 = vsel %vm407, %v491, 0
        %v515 = vsel %vm407, %v492, 0
        %v518 = vsel %vm407, %v493, 0
        %v521 = vsel %vm407, %v494, 0
        %v524 = vsel %vm407, %v495, 0
        %v527 = vsel %vm407, %v496, 0
        %529 = vmatpush.msra.mxu0 0.0
        %530 = vmatpush.msra.mxu0 0.0
        %531 = vmatpush.msra.mxu0 0.0
        %532 = vmatpush.msra.mxu0 0.0
        %533 = vmatpush.msra.mxu0 0.0
        %534 = vmatpush.msra.mxu0 0.0
        %535 = vmatpush.msra.mxu0 0.0
        %536 = vmatpush.msra.mxu0 0.0
        %537 = vmatpush.msra.mxu0 0.0
        %538 = vmatpush.msra.mxu0 0.0
        %539 = vmatpush.msra.mxu0 0.0
        %540 = vmatpush.msra.mxu0 0.0
        %541 = vmatpush.msra.mxu0 0.0
        %542 = vmatpush.msra.mxu0 0.0
        %543 = vmatpush.msra.mxu0 0.0
        %544 = vmatpush.msra.mxu0 %v351
        %545 = vmatmul.f32.gmra.mxu0 %v506
        %v546 = vpop.f32.mrf.mxu0
        %v547 = vadd.f32 %v450, %v546
        %548 = vmatmul.f32.gmra.mxu0 %v509
        %v549 = vpop.f32.mrf.mxu0
        %v550 = vadd.f32 %v453, %v549
        %551 = vmatmul.f32.gmra.mxu0 %v512
        %v552 = vpop.f32.mrf.mxu0
        %v553 = vadd.f32 %v456, %v552
        %554 = vmatmul.f32.gmra.mxu0 %v515
        %v555 = vpop.f32.mrf.mxu0
        %v556 = vadd.f32 %v459, %v555
        %557 = vmatmul.f32.gmra.mxu0 %v518
        %v558 = vpop.f32.mrf.mxu0
        %v559 = vadd.f32 %v462, %v558
        %560 = vmatmul.f32.gmra.mxu0 %v521
        %v561 = vpop.f32.mrf.mxu0
        %v562 = vadd.f32 %v465, %v561
        %563 = vmatmul.f32.gmra.mxu0 %v524
        %v564 = vpop.f32.mrf.mxu0
        %v565 = vadd.f32 %v468, %v564
        %566 = vmatmul.f32.gmra.mxu0 %v527
        %v567 = vpop.f32.mrf.mxu0
        %v568 = vadd.f32 %v471, %v567
        %569 = vdwg.mxu0
        %vm570 = vcmask 523264
        %v571 = vsel %vm570, %v547, -inf
        %572 = vmax.xlane.f32.xlu0 %v571
        %v573 = vpop.xlane.xlu0 %572
        %v574 = vsel %vm570, %v550, -inf
        %575 = vmax.xlane.f32.xlu0 %v574
        %v576 = vpop.xlane.xlu0 %575
        %v577 = vsel %vm570, %v553, -inf
        %578 = vmax.xlane.f32.xlu0 %v577
        %v579 = vpop.xlane.xlu0 %578
        %v580 = vsel %vm570, %v556, -inf
        %581 = vmax.xlane.f32.xlu0 %v580
        %v582 = vpop.xlane.xlu0 %581
        %v583 = vsel %vm570, %v559, -inf
        %584 = vmax.xlane.f32.xlu0 %v583
        %v585 = vpop.xlane.xlu0 %584
        %v586 = vsel %vm570, %v562, -inf
        %587 = vmax.xlane.f32.xlu0 %v586
        %v588 = vpop.xlane.xlu0 %587
        %v589 = vsel %vm570, %v565, -inf
        %590 = vmax.xlane.f32.xlu0 %v589
        %v591 = vpop.xlane.xlu0 %590
        %v592 = vsel %vm570, %v568, -inf
        %593 = vmax.xlane.f32.xlu0 %v592
        %v594 = vpop.xlane.xlu0 %593
        %v595 = vsub.f32 %v547, %v573
        %v596 = vsub.f32 %v550, %v576
        %v597 = vsub.f32 %v553, %v579
        %v598 = vsub.f32 %v556, %v582
        %v599 = vsub.f32 %v559, %v585
        %v600 = vsub.f32 %v562, %v588
        %v601 = vsub.f32 %v565, %v591
        %v602 = vsub.f32 %v568, %v594
        %v603 = vmul.f32 %v595, 1.442695
        %v604 = vpow.pop %v603
        %v605 = vmul.f32 %v596, 1.442695
        %v606 = vpow.pop %v605
        %v607 = vmul.f32 %v597, 1.442695
        %v608 = vpow.pop %v607
        %v609 = vmul.f32 %v598, 1.442695
        %v610 = vpow.pop %v609
        %v611 = vmul.f32 %v599, 1.442695
        %v612 = vpow.pop %v611
        %v613 = vmul.f32 %v600, 1.442695
        %v614 = vpow.pop %v613
        %v615 = vmul.f32 %v601, 1.442695
        %v616 = vpow.pop %v615
        %v617 = vmul.f32 %v602, 1.442695
        %v618 = vpow.pop %v617
        %v619 = vsel %vm570, %v604, 0.0
        %620 = vadd.xlane.f32.xlu0 %v619
        %v621 = vpop.xlane.xlu0 %620
        %v622 = vsel %vm570, %v606, 0.0
        %623 = vadd.xlane.f32.xlu0 %v622
        %v624 = vpop.xlane.xlu0 %623
        %v625 = vsel %vm570, %v608, 0.0
        %626 = vadd.xlane.f32.xlu0 %v625
        %v627 = vpop.xlane.xlu0 %626
        %v628 = vsel %vm570, %v610, 0.0
        %629 = vadd.xlane.f32.xlu0 %v628
        %v630 = vpop.xlane.xlu0 %629
        %v631 = vsel %vm570, %v612, 0.0
        %632 = vadd.xlane.f32.xlu0 %v631
        %v633 = vpop.xlane.xlu0 %632
        %v634 = vsel %vm570, %v614, 0.0
        %635 = vadd.xlane.f32.xlu0 %v634
        %v636 = vpop.xlane.xlu0 %635
        %v637 = vsel %vm570, %v616, 0.0
        %638 = vadd.xlane.f32.xlu0 %v637
        %v639 = vpop.xlane.xlu0 %638
        %v640 = vsel %vm570, %v618, 0.0
        %641 = vadd.xlane.f32.xlu0 %v640
        %v642 = vpop.xlane.xlu0 %641
        %v643 = vrcp.pop %v621
        %v644 = vrcp.pop %v624
        %v645 = vrcp.pop %v627
        %v646 = vrcp.pop %v630
        %v647 = vrcp.pop %v633
        %v648 = vrcp.pop %v636
        %v649 = vrcp.pop %v639
        %v650 = vrcp.pop %v642
        %v651 = vmul.f32 %v604, %v643
        %v652 = vmul.f32 %v606, %v644
        %v653 = vmul.f32 %v608, %v645
        %v654 = vmul.f32 %v610, %v646
        %v655 = vmul.f32 %v612, %v647
        %v656 = vmul.f32 %v614, %v648
        %v657 = vmul.f32 %v616, %v649
        %v658 = vmul.f32 %v618, %v650
        %v660 = vsel %vm570, %v363, 0
        %v663 = vsel %vm570, %v651, 0
        %v666 = vsel %vm570, %v652, 0
        %v669 = vsel %vm570, %v653, 0
        %v672 = vsel %vm570, %v654, 0
        %v675 = vsel %vm570, %v655, 0
        %v678 = vsel %vm570, %v656, 0
        %v681 = vsel %vm570, %v657, 0
        %v684 = vsel %vm570, %v658, 0
        %686 = vmatpush.xpose.msra.mxu0 0.0
        %687 = vmatpush.xpose.msra.mxu0 0.0
        %688 = vmatpush.xpose.msra.mxu0 0.0
        %689 = vmatpush.xpose.msra.mxu0 0.0
        %690 = vmatpush.xpose.msra.mxu0 0.0
        %691 = vmatpush.xpose.msra.mxu0 0.0
        %692 = vmatpush.xpose.msra.mxu0 0.0
        %693 = vmatpush.xpose.msra.mxu0 0.0
        %694 = vmatpush.xpose.msra.mxu0 %v684
        %695 = vmatpush.xpose.msra.mxu0 %v681
        %696 = vmatpush.xpose.msra.mxu0 %v678
        %697 = vmatpush.xpose.msra.mxu0 %v675
        %698 = vmatpush.xpose.msra.mxu0 %v672
        %699 = vmatpush.xpose.msra.mxu0 %v669
        %700 = vmatpush.xpose.msra.mxu0 %v666
        %701 = vmatpush.xpose.msra.mxu0 %v663
        %702 = vmatmul.f32.gmra.mxu0 %v660
        %v703 = vpop.f32.mrf.mxu0
        %v704 = vadd.f32 0.0, %v703
        %705 = vdwg.mxu0
        %s706 = scalar_lea.vmem %s3, 8
        %v707 = vld [vmem:[%s706] sm:$0xff]
        %708 = vxpose.xlu0.b32.start [1/16] %v707, 128
        %709 = vxpose.xlu0.b32.cont [2/16] 0.0, 128
        %710 = vxpose.xlu0.b32.cont [3/16] 0.0, 128
        %711 = vxpose.xlu0.b32.cont [4/16] 0.0, 128
        %712 = vxpose.xlu0.b32.cont [5/16] 0.0, 128
        %713 = vxpose.xlu0.b32.cont [6/16] 0.0, 128
        %714 = vxpose.xlu0.b32.cont [7/16] 0.0, 128
        %715 = vxpose.xlu0.b32.cont [8/16] 0.0, 128
        %716 = vxpose.xlu0.b32.cont [9/16] 0.0, 128
        %717 = vxpose.xlu0.b32.cont [10/16] 0.0, 128
        %718 = vxpose.xlu0.b32.cont [11/16] 0.0, 128
        %719 = vxpose.xlu0.b32.cont [12/16] 0.0, 128
        %720 = vxpose.xlu0.b32.cont [13/16] 0.0, 128
        %721 = vxpose.xlu0.b32.cont [14/16] 0.0, 128
        %722 = vxpose.xlu0.b32.cont [15/16] 0.0, 128
        %723 = vxpose.xlu0.b32.end [16/16] 0.0, 128
        %v724 = vpop.trf.xlu0
        %v725 = vpop.trf.xlu0
        %v726 = vpop.trf.xlu0
        %v727 = vpop.trf.xlu0
        %v728 = vpop.trf.xlu0
        %v729 = vpop.trf.xlu0
        %v730 = vpop.trf.xlu0
        %v731 = vpop.trf.xlu0
        %v732 = vpop.trf.xlu0
        %v733 = vpop.trf.xlu0
        %v734 = vpop.trf.xlu0
        %v735 = vpop.trf.xlu0
        %v736 = vpop.trf.xlu0
        %v737 = vpop.trf.xlu0
        %v738 = vpop.trf.xlu0
        %v739 = vpop.trf.xlu0
        %v741 = vsel %vm407, %v724, 0
        %v744 = vsel %vm407, %v725, 0
        %v747 = vsel %vm407, %v726, 0
        %v750 = vsel %vm407, %v727, 0
        %v753 = vsel %vm407, %v728, 0
        %v756 = vsel %vm407, %v729, 0
        %v759 = vsel %vm407, %v730, 0
        %v762 = vsel %vm407, %v731, 0
        %764 = vmatpush.msra.mxu0 0.0
        %765 = vmatpush.msra.mxu0 0.0
        %766 = vmatpush.msra.mxu0 0.0
        %767 = vmatpush.msra.mxu0 0.0
        %768 = vmatpush.msra.mxu0 0.0
        %769 = vmatpush.msra.mxu0 0.0
        %770 = vmatpush.msra.mxu0 0.0
        %771 = vmatpush.msra.mxu0 0.0
        %772 = vmatpush.msra.mxu0 0.0
        %773 = vmatpush.msra.mxu0 0.0
        %774 = vmatpush.msra.mxu0 0.0
        %775 = vmatpush.msra.mxu0 0.0
        %776 = vmatpush.msra.mxu0 0.0
        %777 = vmatpush.msra.mxu0 0.0
        %778 = vmatpush.msra.mxu0 0.0
        %779 = vmatpush.msra.mxu0 %v342
        %780 = vmatmul.f32.gmra.mxu0 %v741
        %v781 = vpop.f32.mrf.mxu0
        %v782 = vadd.f32 0.0, %v781
        %783 = vmatmul.f32.gmra.mxu0 %v744
        %v784 = vpop.f32.mrf.mxu0
        %v785 = vadd.f32 0.0, %v784
        %786 = vmatmul.f32.gmra.mxu0 %v747
        %v787 = vpop.f32.mrf.mxu0
        %v788 = vadd.f32 0.0, %v787
        %789 = vmatmul.f32.gmra.mxu0 %v750
        %v790 = vpop.f32.mrf.mxu0
        %v791 = vadd.f32 0.0, %v790
        %792 = vmatmul.f32.gmra.mxu0 %v753
        %v793 = vpop.f32.mrf.mxu0
        %v794 = vadd.f32 0.0, %v793
        %795 = vmatmul.f32.gmra.mxu0 %v756
        %v796 = vpop.f32.mrf.mxu0
        %v797 = vadd.f32 0.0, %v796
        %798 = vmatmul.f32.gmra.mxu0 %v759
        %v799 = vpop.f32.mrf.mxu0
        %v800 = vadd.f32 0.0, %v799
        %801 = vmatmul.f32.gmra.mxu0 %v762
        %v802 = vpop.f32.mrf.mxu0
        %v803 = vadd.f32 0.0, %v802
        %804 = vdwg.mxu0
        %805 = vxpose.xlu0.b32.start [1/16] %v342, 128
        %806 = vxpose.xlu0.b32.cont [2/16] 0.0, 128
        %807 = vxpose.xlu0.b32.cont [3/16] 0.0, 128
        %808 = vxpose.xlu0.b32.cont [4/16] 0.0, 128
        %809 = vxpose.xlu0.b32.cont [5/16] 0.0, 128
        %810 = vxpose.xlu0.b32.cont [6/16] 0.0, 128
        %811 = vxpose.xlu0.b32.cont [7/16] 0.0, 128
        %812 = vxpose.xlu0.b32.cont [8/16] 0.0, 128
        %813 = vxpose.xlu0.b32.cont [9/16] 0.0, 128
        %814 = vxpose.xlu0.b32.cont [10/16] 0.0, 128
        %815 = vxpose.xlu0.b32.cont [11/16] 0.0, 128
        %816 = vxpose.xlu0.b32.cont [12/16] 0.0, 128
        %817 = vxpose.xlu0.b32.cont [13/16] 0.0, 128
        %818 = vxpose.xlu0.b32.cont [14/16] 0.0, 128
        %819 = vxpose.xlu0.b32.cont [15/16] 0.0, 128
        %820 = vxpose.xlu0.b32.end [16/16] 0.0, 128
        %v821 = vpop.trf.xlu0
        %v822 = vpop.trf.xlu0
        %v823 = vpop.trf.xlu0
        %v824 = vpop.trf.xlu0
        %v825 = vpop.trf.xlu0
        %v826 = vpop.trf.xlu0
        %v827 = vpop.trf.xlu0
        %v828 = vpop.trf.xlu0
        %v829 = vpop.trf.xlu0
        %v830 = vpop.trf.xlu0
        %v831 = vpop.trf.xlu0
        %v832 = vpop.trf.xlu0
        %v833 = vpop.trf.xlu0
        %v834 = vpop.trf.xlu0
        %v835 = vpop.trf.xlu0
        %v836 = vpop.trf.xlu0
        %v838 = vsel %vm407, %v821, 0
        %v841 = vsel %vm407, %v822, 0
        %v844 = vsel %vm407, %v823, 0
        %v847 = vsel %vm407, %v824, 0
        %v850 = vsel %vm407, %v825, 0
        %v853 = vsel %vm407, %v826, 0
        %v856 = vsel %vm407, %v827, 0
        %v859 = vsel %vm407, %v828, 0
        %861 = vmatpush.msra.mxu0 0.0
        %862 = vmatpush.msra.mxu0 0.0
        %863 = vmatpush.msra.mxu0 0.0
        %864 = vmatpush.msra.mxu0 0.0
        %865 = vmatpush.msra.mxu0 0.0
        %866 = vmatpush.msra.mxu0 0.0
        %867 = vmatpush.msra.mxu0 0.0
        %868 = vmatpush.msra.mxu0 0.0
        %869 = vmatpush.msra.mxu0 0.0
        %870 = vmatpush.msra.mxu0 0.0
        %871 = vmatpush.msra.mxu0 0.0
        %872 = vmatpush.msra.mxu0 0.0
        %873 = vmatpush.msra.mxu0 0.0
        %874 = vmatpush.msra.mxu0 0.0
        %875 = vmatpush.msra.mxu0 0.0
        %876 = vmatpush.msra.mxu0 %v354
        %877 = vmatmul.f32.gmra.mxu0 %v838
        %v878 = vpop.f32.mrf.mxu0
        %v879 = vadd.f32 %v782, %v878
        %880 = vmatmul.f32.gmra.mxu0 %v841
        %v881 = vpop.f32.mrf.mxu0
        %v882 = vadd.f32 %v785, %v881
        %883 = vmatmul.f32.gmra.mxu0 %v844
        %v884 = vpop.f32.mrf.mxu0
        %v885 = vadd.f32 %v788, %v884
        %886 = vmatmul.f32.gmra.mxu0 %v847
        %v887 = vpop.f32.mrf.mxu0
        %v888 = vadd.f32 %v791, %v887
        %889 = vmatmul.f32.gmra.mxu0 %v850
        %v890 = vpop.f32.mrf.mxu0
        %v891 = vadd.f32 %v794, %v890
        %892 = vmatmul.f32.gmra.mxu0 %v853
        %v893 = vpop.f32.mrf.mxu0
        %v894 = vadd.f32 %v797, %v893
        %895 = vmatmul.f32.gmra.mxu0 %v856
        %v896 = vpop.f32.mrf.mxu0
        %v897 = vadd.f32 %v800, %v896
        %898 = vmatmul.f32.gmra.mxu0 %v859
        %v899 = vpop.f32.mrf.mxu0
        %v900 = vadd.f32 %v803, %v899
        %901 = vdwg.mxu0
        %v902 = vsel %vm570, %v879, -inf
        %903 = vmax.xlane.f32.xlu0 %v902
        %v904 = vpop.xlane.xlu0 %903
        %v905 = vsel %vm570, %v882, -inf
        %906 = vmax.xlane.f32.xlu0 %v905
        %v907 = vpop.xlane.xlu0 %906
        %v908 = vsel %vm570, %v885, -inf
        %909 = vmax.xlane.f32.xlu0 %v908
        %v910 = vpop.xlane.xlu0 %909
        %v911 = vsel %vm570, %v888, -inf
        %912 = vmax.xlane.f32.xlu0 %v911
        %v913 = vpop.xlane.xlu0 %912
        %v914 = vsel %vm570, %v891, -inf
        %915 = vmax.xlane.f32.xlu0 %v914
        %v916 = vpop.xlane.xlu0 %915
        %v917 = vsel %vm570, %v894, -inf
        %918 = vmax.xlane.f32.xlu0 %v917
        %v919 = vpop.xlane.xlu0 %918
        %v920 = vsel %vm570, %v897, -inf
        %921 = vmax.xlane.f32.xlu0 %v920
        %v922 = vpop.xlane.xlu0 %921
        %v923 = vsel %vm570, %v900, -inf
        %924 = vmax.xlane.f32.xlu0 %v923
        %v925 = vpop.xlane.xlu0 %924
        %v926 = vsub.f32 %v879, %v904
        %v927 = vsub.f32 %v882, %v907
        %v928 = vsub.f32 %v885, %v910
        %v929 = vsub.f32 %v888, %v913
        %v930 = vsub.f32 %v891, %v916
        %v931 = vsub.f32 %v894, %v919
        %v932 = vsub.f32 %v897, %v922
        %v933 = vsub.f32 %v900, %v925
        %v934 = vmul.f32 %v926, 1.442695
        %v935 = vpow.pop %v934
        %v936 = vmul.f32 %v927, 1.442695
        %v937 = vpow.pop %v936
        %v938 = vmul.f32 %v928, 1.442695
        %v939 = vpow.pop %v938
        %v940 = vmul.f32 %v929, 1.442695
        %v941 = vpow.pop %v940
        %v942 = vmul.f32 %v930, 1.442695
        %v943 = vpow.pop %v942
        %v944 = vmul.f32 %v931, 1.442695
        %v945 = vpow.pop %v944
        %v946 = vmul.f32 %v932, 1.442695
        %v947 = vpow.pop %v946
        %v948 = vmul.f32 %v933, 1.442695
        %v949 = vpow.pop %v948
        %v950 = vsel %vm570, %v935, 0.0
        %951 = vadd.xlane.f32.xlu0 %v950
        %v952 = vpop.xlane.xlu0 %951
        %v953 = vsel %vm570, %v937, 0.0
        %954 = vadd.xlane.f32.xlu0 %v953
        %v955 = vpop.xlane.xlu0 %954
        %v956 = vsel %vm570, %v939, 0.0
        %957 = vadd.xlane.f32.xlu0 %v956
        %v958 = vpop.xlane.xlu0 %957
        %v959 = vsel %vm570, %v941, 0.0
        %960 = vadd.xlane.f32.xlu0 %v959
        %v961 = vpop.xlane.xlu0 %960
        %v962 = vsel %vm570, %v943, 0.0
        %963 = vadd.xlane.f32.xlu0 %v962
        %v964 = vpop.xlane.xlu0 %963
        %v965 = vsel %vm570, %v945, 0.0
        %966 = vadd.xlane.f32.xlu0 %v965
        %v967 = vpop.xlane.xlu0 %966
        %v968 = vsel %vm570, %v947, 0.0
        %969 = vadd.xlane.f32.xlu0 %v968
        %v970 = vpop.xlane.xlu0 %969
        %v971 = vsel %vm570, %v949, 0.0
        %972 = vadd.xlane.f32.xlu0 %v971
        %v973 = vpop.xlane.xlu0 %972
        %v974 = vrcp.pop %v952
        %v975 = vrcp.pop %v955
        %v976 = vrcp.pop %v958
        %v977 = vrcp.pop %v961
        %v978 = vrcp.pop %v964
        %v979 = vrcp.pop %v967
        %v980 = vrcp.pop %v970
        %v981 = vrcp.pop %v973
        %v982 = vmul.f32 %v935, %v974
        %v983 = vmul.f32 %v937, %v975
        %v984 = vmul.f32 %v939, %v976
        %v985 = vmul.f32 %v941, %v977
        %v986 = vmul.f32 %v943, %v978
        %v987 = vmul.f32 %v945, %v979
        %v988 = vmul.f32 %v947, %v980
        %v989 = vmul.f32 %v949, %v981
        %v991 = vsel %vm570, %v366, 0
        %v994 = vsel %vm570, %v982, 0
        %v997 = vsel %vm570, %v983, 0
        %v1000 = vsel %vm570, %v984, 0
        %v1003 = vsel %vm570, %v985, 0
        %v1006 = vsel %vm570, %v986, 0
        %v1009 = vsel %vm570, %v987, 0
        %v1012 = vsel %vm570, %v988, 0
        %v1015 = vsel %vm570, %v989, 0
        %1017 = vmatpush.xpose.msra.mxu0 0.0
        %1018 = vmatpush.xpose.msra.mxu0 0.0
        %1019 = vmatpush.xpose.msra.mxu0 0.0
        %1020 = vmatpush.xpose.msra.mxu0 0.0
        %1021 = vmatpush.xpose.msra.mxu0 0.0
        %1022 = vmatpush.xpose.msra.mxu0 0.0
        %1023 = vmatpush.xpose.msra.mxu0 0.0
        %1024 = vmatpush.xpose.msra.mxu0 0.0
        %1025 = vmatpush.xpose.msra.mxu0 %v1015
        %1026 = vmatpush.xpose.msra.mxu0 %v1012
        %1027 = vmatpush.xpose.msra.mxu0 %v1009
        %1028 = vmatpush.xpose.msra.mxu0 %v1006
        %1029 = vmatpush.xpose.msra.mxu0 %v1003
        %1030 = vmatpush.xpose.msra.mxu0 %v1000
        %1031 = vmatpush.xpose.msra.mxu0 %v997
        %1032 = vmatpush.xpose.msra.mxu0 %v994
        %1033 = vmatmul.f32.gmra.mxu0 %v991
        %v1034 = vpop.f32.mrf.mxu0
        %v1035 = vadd.f32 0.0, %v1034
        %1036 = vdwg.mxu0
        %s1037 = scalar_lea.vmem %s3, 16
        %v1038 = vld [vmem:[%s1037] sm:$0xff]
        %1039 = vxpose.xlu0.b32.start [1/16] %v1038, 128
        %1040 = vxpose.xlu0.b32.cont [2/16] 0.0, 128
        %1041 = vxpose.xlu0.b32.cont [3/16] 0.0, 128
        %1042 = vxpose.xlu0.b32.cont [4/16] 0.0, 128
        %1043 = vxpose.xlu0.b32.cont [5/16] 0.0, 128
        %1044 = vxpose.xlu0.b32.cont [6/16] 0.0, 128
        %1045 = vxpose.xlu0.b32.cont [7/16] 0.0, 128
        %1046 = vxpose.xlu0.b32.cont [8/16] 0.0, 128
        %1047 = vxpose.xlu0.b32.cont [9/16] 0.0, 128
        %1048 = vxpose.xlu0.b32.cont [10/16] 0.0, 128
        %1049 = vxpose.xlu0.b32.cont [11/16] 0.0, 128
        %1050 = vxpose.xlu0.b32.cont [12/16] 0.0, 128
        %1051 = vxpose.xlu0.b32.cont [13/16] 0.0, 128
        %1052 = vxpose.xlu0.b32.cont [14/16] 0.0, 128
        %1053 = vxpose.xlu0.b32.cont [15/16] 0.0, 128
        %1054 = vxpose.xlu0.b32.end [16/16] 0.0, 128
        %v1055 = vpop.trf.xlu0
        %v1056 = vpop.trf.xlu0
        %v1057 = vpop.trf.xlu0
        %v1058 = vpop.trf.xlu0
        %v1059 = vpop.trf.xlu0
        %v1060 = vpop.trf.xlu0
        %v1061 = vpop.trf.xlu0
        %v1062 = vpop.trf.xlu0
        %v1063 = vpop.trf.xlu0
        %v1064 = vpop.trf.xlu0
        %v1065 = vpop.trf.xlu0
        %v1066 = vpop.trf.xlu0
        %v1067 = vpop.trf.xlu0
        %v1068 = vpop.trf.xlu0
        %v1069 = vpop.trf.xlu0
        %v1070 = vpop.trf.xlu0
        %v1072 = vsel %vm407, %v1055, 0
        %v1075 = vsel %vm407, %v1056, 0
        %v1078 = vsel %vm407, %v1057, 0
        %v1081 = vsel %vm407, %v1058, 0
        %v1084 = vsel %vm407, %v1059, 0
        %v1087 = vsel %vm407, %v1060, 0
        %v1090 = vsel %vm407, %v1061, 0
        %v1093 = vsel %vm407, %v1062, 0
        %1095 = vmatpush.msra.mxu0 0.0
        %1096 = vmatpush.msra.mxu0 0.0
        %1097 = vmatpush.msra.mxu0 0.0
        %1098 = vmatpush.msra.mxu0 0.0
        %1099 = vmatpush.msra.mxu0 0.0
        %1100 = vmatpush.msra.mxu0 0.0
        %1101 = vmatpush.msra.mxu0 0.0
        %1102 = vmatpush.msra.mxu0 0.0
        %1103 = vmatpush.msra.mxu0 0.0
        %1104 = vmatpush.msra.mxu0 0.0
        %1105 = vmatpush.msra.mxu0 0.0
        %1106 = vmatpush.msra.mxu0 0.0
        %1107 = vmatpush.msra.mxu0 0.0
        %1108 = vmatpush.msra.mxu0 0.0
        %1109 = vmatpush.msra.mxu0 0.0
        %1110 = vmatpush.msra.mxu0 %v345
        %1111 = vmatmul.f32.gmra.mxu0 %v1072
        %v1112 = vpop.f32.mrf.mxu0
        %v1113 = vadd.f32 0.0, %v1112
        %1114 = vmatmul.f32.gmra.mxu0 %v1075
        %v1115 = vpop.f32.mrf.mxu0
        %v1116 = vadd.f32 0.0, %v1115
        %1117 = vmatmul.f32.gmra.mxu0 %v1078
        %v1118 = vpop.f32.mrf.mxu0
        %v1119 = vadd.f32 0.0, %v1118
        %1120 = vmatmul.f32.gmra.mxu0 %v1081
        %v1121 = vpop.f32.mrf.mxu0
        %v1122 = vadd.f32 0.0, %v1121
        %1123 = vmatmul.f32.gmra.mxu0 %v1084
        %v1124 = vpop.f32.mrf.mxu0
        %v1125 = vadd.f32 0.0, %v1124
        %1126 = vmatmul.f32.gmra.mxu0 %v1087
        %v1127 = vpop.f32.mrf.mxu0
        %v1128 = vadd.f32 0.0, %v1127
        %1129 = vmatmul.f32.gmra.mxu0 %v1090
        %v1130 = vpop.f32.mrf.mxu0
        %v1131 = vadd.f32 0.0, %v1130
        %1132 = vmatmul.f32.gmra.mxu0 %v1093
        %v1133 = vpop.f32.mrf.mxu0
        %v1134 = vadd.f32 0.0, %v1133
        %1135 = vdwg.mxu0
        %1136 = vxpose.xlu0.b32.start [1/16] %v345, 128
        %1137 = vxpose.xlu0.b32.cont [2/16] 0.0, 128
        %1138 = vxpose.xlu0.b32.cont [3/16] 0.0, 128
        %1139 = vxpose.xlu0.b32.cont [4/16] 0.0, 128
        %1140 = vxpose.xlu0.b32.cont [5/16] 0.0, 128
        %1141 = vxpose.xlu0.b32.cont [6/16] 0.0, 128
        %1142 = vxpose.xlu0.b32.cont [7/16] 0.0, 128
        %1143 = vxpose.xlu0.b32.cont [8/16] 0.0, 128
        %1144 = vxpose.xlu0.b32.cont [9/16] 0.0, 128
        %1145 = vxpose.xlu0.b32.cont [10/16] 0.0, 128
        %1146 = vxpose.xlu0.b32.cont [11/16] 0.0, 128
        %1147 = vxpose.xlu0.b32.cont [12/16] 0.0, 128
        %1148 = vxpose.xlu0.b32.cont [13/16] 0.0, 128
        %1149 = vxpose.xlu0.b32.cont [14/16] 0.0, 128
        %1150 = vxpose.xlu0.b32.cont [15/16] 0.0, 128
        %1151 = vxpose.xlu0.b32.end [16/16] 0.0, 128
        %v1152 = vpop.trf.xlu0
        %v1153 = vpop.trf.xlu0
        %v1154 = vpop.trf.xlu0
        %v1155 = vpop.trf.xlu0
        %v1156 = vpop.trf.xlu0
        %v1157 = vpop.trf.xlu0
        %v1158 = vpop.trf.xlu0
        %v1159 = vpop.trf.xlu0
        %v1160 = vpop.trf.xlu0
        %v1161 = vpop.trf.xlu0
        %v1162 = vpop.trf.xlu0
        %v1163 = vpop.trf.xlu0
        %v1164 = vpop.trf.xlu0
        %v1165 = vpop.trf.xlu0
        %v1166 = vpop.trf.xlu0
        %v1167 = vpop.trf.xlu0
        %v1169 = vsel %vm407, %v1152, 0
        %v1172 = vsel %vm407, %v1153, 0
        %v1175 = vsel %vm407, %v1154, 0
        %v1178 = vsel %vm407, %v1155, 0
        %v1181 = vsel %vm407, %v1156, 0
        %v1184 = vsel %vm407, %v1157, 0
        %v1187 = vsel %vm407, %v1158, 0
        %v1190 = vsel %vm407, %v1159, 0
        %1192 = vmatpush.msra.mxu0 0.0
        %1193 = vmatpush.msra.mxu0 0.0
        %1194 = vmatpush.msra.mxu0 0.0
        %1195 = vmatpush.msra.mxu0 0.0
        %1196 = vmatpush.msra.mxu0 0.0
        %1197 = vmatpush.msra.mxu0 0.0
        %1198 = vmatpush.msra.mxu0 0.0
        %1199 = vmatpush.msra.mxu0 0.0
        %1200 = vmatpush.msra.mxu0 0.0
        %1201 = vmatpush.msra.mxu0 0.0
        %1202 = vmatpush.msra.mxu0 0.0
        %1203 = vmatpush.msra.mxu0 0.0
        %1204 = vmatpush.msra.mxu0 0.0
        %1205 = vmatpush.msra.mxu0 0.0
        %1206 = vmatpush.msra.mxu0 0.0
        %1207 = vmatpush.msra.mxu0 %v357
        %1208 = vmatmul.f32.gmra.mxu0 %v1169
        %v1209 = vpop.f32.mrf.mxu0
        %v1210 = vadd.f32 %v1113, %v1209
        %1211 = vmatmul.f32.gmra.mxu0 %v1172
        %v1212 = vpop.f32.mrf.mxu0
        %v1213 = vadd.f32 %v1116, %v1212
        %1214 = vmatmul.f32.gmra.mxu0 %v1175
        %v1215 = vpop.f32.mrf.mxu0
        %v1216 = vadd.f32 %v1119, %v1215
        %1217 = vmatmul.f32.gmra.mxu0 %v1178
        %v1218 = vpop.f32.mrf.mxu0
        %v1219 = vadd.f32 %v1122, %v1218
        %1220 = vmatmul.f32.gmra.mxu0 %v1181
        %v1221 = vpop.f32.mrf.mxu0
        %v1222 = vadd.f32 %v1125, %v1221
        %1223 = vmatmul.f32.gmra.mxu0 %v1184
        %v1224 = vpop.f32.mrf.mxu0
        %v1225 = vadd.f32 %v1128, %v1224
        %1226 = vmatmul.f32.gmra.mxu0 %v1187
        %v1227 = vpop.f32.mrf.mxu0
        %v1228 = vadd.f32 %v1131, %v1227
        %1229 = vmatmul.f32.gmra.mxu0 %v1190
        %v1230 = vpop.f32.mrf.mxu0
        %v1231 = vadd.f32 %v1134, %v1230
        %1232 = vdwg.mxu0
        %v1233 = vsel %vm570, %v1210, -inf
        %1234 = vmax.xlane.f32.xlu0 %v1233
        %v1235 = vpop.xlane.xlu0 %1234
        %v1236 = vsel %vm570, %v1213, -inf
        %1237 = vmax.xlane.f32.xlu0 %v1236
        %v1238 = vpop.xlane.xlu0 %1237
        %v1239 = vsel %vm570, %v1216, -inf
        %1240 = vmax.xlane.f32.xlu0 %v1239
        %v1241 = vpop.xlane.xlu0 %1240
        %v1242 = vsel %vm570, %v1219, -inf
        %1243 = vmax.xlane.f32.xlu0 %v1242
        %v1244 = vpop.xlane.xlu0 %1243
        %v1245 = vsel %vm570, %v1222, -inf
        %1246 = vmax.xlane.f32.xlu0 %v1245
        %v1247 = vpop.xlane.xlu0 %1246
        %v1248 = vsel %vm570, %v1225, -inf
        %1249 = vmax.xlane.f32.xlu0 %v1248
        %v1250 = vpop.xlane.xlu0 %1249
        %v1251 = vsel %vm570, %v1228, -inf
        %1252 = vmax.xlane.f32.xlu0 %v1251
        %v1253 = vpop.xlane.xlu0 %1252
        %v1254 = vsel %vm570, %v1231, -inf
        %1255 = vmax.xlane.f32.xlu0 %v1254
        %v1256 = vpop.xlane.xlu0 %1255
        %v1257 = vsub.f32 %v1210, %v1235
        %v1258 = vsub.f32 %v1213, %v1238
        %v1259 = vsub.f32 %v1216, %v1241
        %v1260 = vsub.f32 %v1219, %v1244
        %v1261 = vsub.f32 %v1222, %v1247
        %v1262 = vsub.f32 %v1225, %v1250
        %v1263 = vsub.f32 %v1228, %v1253
        %v1264 = vsub.f32 %v1231, %v1256
        %v1265 = vmul.f32 %v1257, 1.442695
        %v1266 = vpow.pop %v1265
        %v1267 = vmul.f32 %v1258, 1.442695
        %v1268 = vpow.pop %v1267
        %v1269 = vmul.f32 %v1259, 1.442695
        %v1270 = vpow.pop %v1269
        %v1271 = vmul.f32 %v1260, 1.442695
        %v1272 = vpow.pop %v1271
        %v1273 = vmul.f32 %v1261, 1.442695
        %v1274 = vpow.pop %v1273
        %v1275 = vmul.f32 %v1262, 1.442695
        %v1276 = vpow.pop %v1275
        %v1277 = vmul.f32 %v1263, 1.442695
        %v1278 = vpow.pop %v1277
        %v1279 = vmul.f32 %v1264, 1.442695
        %v1280 = vpow.pop %v1279
        %v1281 = vsel %vm570, %v1266, 0.0
        %1282 = vadd.xlane.f32.xlu0 %v1281
        %v1283 = vpop.xlane.xlu0 %1282
        %v1284 = vsel %vm570, %v1268, 0.0
        %1285 = vadd.xlane.f32.xlu0 %v1284
        %v1286 = vpop.xlane.xlu0 %1285
        %v1287 = vsel %vm570, %v1270, 0.0
        %1288 = vadd.xlane.f32.xlu0 %v1287
        %v1289 = vpop.xlane.xlu0 %1288
        %v1290 = vsel %vm570, %v1272, 0.0
        %1291 = vadd.xlane.f32.xlu0 %v1290
        %v1292 = vpop.xlane.xlu0 %1291
        %v1293 = vsel %vm570, %v1274, 0.0
        %1294 = vadd.xlane.f32.xlu0 %v1293
        %v1295 = vpop.xlane.xlu0 %1294
        %v1296 = vsel %vm570, %v1276, 0.0
        %1297 = vadd.xlane.f32.xlu0 %v1296
        %v1298 = vpop.xlane.xlu0 %1297
        %v1299 = vsel %vm570, %v1278, 0.0
        %1300 = vadd.xlane.f32.xlu0 %v1299
        %v1301 = vpop.xlane.xlu0 %1300
        %v1302 = vsel %vm570, %v1280, 0.0
        %1303 = vadd.xlane.f32.xlu0 %v1302
        %v1304 = vpop.xlane.xlu0 %1303
        %v1305 = vrcp.pop %v1283
        %v1306 = vrcp.pop %v1286
        %v1307 = vrcp.pop %v1289
        %v1308 = vrcp.pop %v1292
        %v1309 = vrcp.pop %v1295
        %v1310 = vrcp.pop %v1298
        %v1311 = vrcp.pop %v1301
        %v1312 = vrcp.pop %v1304
        %v1313 = vmul.f32 %v1266, %v1305
        %v1314 = vmul.f32 %v1268, %v1306
        %v1315 = vmul.f32 %v1270, %v1307
        %v1316 = vmul.f32 %v1272, %v1308
        %v1317 = vmul.f32 %v1274, %v1309
        %v1318 = vmul.f32 %v1276, %v1310
        %v1319 = vmul.f32 %v1278, %v1311
        %v1320 = vmul.f32 %v1280, %v1312
        %v1322 = vsel %vm570, %v369, 0
        %v1325 = vsel %vm570, %v1313, 0
        %v1328 = vsel %vm570, %v1314, 0
        %v1331 = vsel %vm570, %v1315, 0
        %v1334 = vsel %vm570, %v1316, 0
        %v1337 = vsel %vm570, %v1317, 0
        %v1340 = vsel %vm570, %v1318, 0
        %v1343 = vsel %vm570, %v1319, 0
        %v1346 = vsel %vm570, %v1320, 0
        %1348 = vmatpush.xpose.msra.mxu0 0.0
        %1349 = vmatpush.xpose.msra.mxu0 0.0
        %1350 = vmatpush.xpose.msra.mxu0 0.0
        %1351 = vmatpush.xpose.msra.mxu0 0.0
        %1352 = vmatpush.xpose.msra.mxu0 0.0
        %1353 = vmatpush.xpose.msra.mxu0 0.0
        %1354 = vmatpush.xpose.msra.mxu0 0.0
        %1355 = vmatpush.xpose.msra.mxu0 0.0
        %1356 = vmatpush.xpose.msra.mxu0 %v1346
        %1357 = vmatpush.xpose.msra.mxu0 %v1343
        %1358 = vmatpush.xpose.msra.mxu0 %v1340
        %1359 = vmatpush.xpose.msra.mxu0 %v1337
        %1360 = vmatpush.xpose.msra.mxu0 %v1334
        %1361 = vmatpush.xpose.msra.mxu0 %v1331
        %1362 = vmatpush.xpose.msra.mxu0 %v1328
        %1363 = vmatpush.xpose.msra.mxu0 %v1325
        %1364 = vmatmul.f32.gmra.mxu0 %v1322
        %v1365 = vpop.f32.mrf.mxu0
        %v1366 = vadd.f32 0.0, %v1365
        %1367 = vdwg.mxu0
        %s1368 = scalar_lea.vmem %s3, 24
        %v1369 = vld [vmem:[%s1368] sm:$0xff]
        %1370 = vxpose.xlu0.b32.start [1/16] %v1369, 128
        %1371 = vxpose.xlu0.b32.cont [2/16] 0.0, 128
        %1372 = vxpose.xlu0.b32.cont [3/16] 0.0, 128
        %1373 = vxpose.xlu0.b32.cont [4/16] 0.0, 128
        %1374 = vxpose.xlu0.b32.cont [5/16] 0.0, 128
        %1375 = vxpose.xlu0.b32.cont [6/16] 0.0, 128
        %1376 = vxpose.xlu0.b32.cont [7/16] 0.0, 128
        %1377 = vxpose.xlu0.b32.cont [8/16] 0.0, 128
        %1378 = vxpose.xlu0.b32.cont [9/16] 0.0, 128
        %1379 = vxpose.xlu0.b32.cont [10/16] 0.0, 128
        %1380 = vxpose.xlu0.b32.cont [11/16] 0.0, 128
        %1381 = vxpose.xlu0.b32.cont [12/16] 0.0, 128
        %1382 = vxpose.xlu0.b32.cont [13/16] 0.0, 128
        %1383 = vxpose.xlu0.b32.cont [14/16] 0.0, 128
        %1384 = vxpose.xlu0.b32.cont [15/16] 0.0, 128
        %1385 = vxpose.xlu0.b32.end [16/16] 0.0, 128
        %v1386 = vpop.trf.xlu0
        %v1387 = vpop.trf.xlu0
        %v1388 = vpop.trf.xlu0
        %v1389 = vpop.trf.xlu0
        %v1390 = vpop.trf.xlu0
        %v1391 = vpop.trf.xlu0
        %v1392 = vpop.trf.xlu0
        %v1393 = vpop.trf.xlu0
        %v1394 = vpop.trf.xlu0
        %v1395 = vpop.trf.xlu0
        %v1396 = vpop.trf.xlu0
        %v1397 = vpop.trf.xlu0
        %v1398 = vpop.trf.xlu0
        %v1399 = vpop.trf.xlu0
        %v1400 = vpop.trf.xlu0
        %v1401 = vpop.trf.xlu0
        %v1403 = vsel %vm407, %v1386, 0
        %v1406 = vsel %vm407, %v1387, 0
        %v1409 = vsel %vm407, %v1388, 0
        %v1412 = vsel %vm407, %v1389, 0
        %v1415 = vsel %vm407, %v1390, 0
        %v1418 = vsel %vm407, %v1391, 0
        %v1421 = vsel %vm407, %v1392, 0
        %v1424 = vsel %vm407, %v1393, 0
        %1426 = vmatpush.msra.mxu0 0.0
        %1427 = vmatpush.msra.mxu0 0.0
        %1428 = vmatpush.msra.mxu0 0.0
        %1429 = vmatpush.msra.mxu0 0.0
        %1430 = vmatpush.msra.mxu0 0.0
        %1431 = vmatpush.msra.mxu0 0.0
        %1432 = vmatpush.msra.mxu0 0.0
        %1433 = vmatpush.msra.mxu0 0.0
        %1434 = vmatpush.msra.mxu0 0.0
        %1435 = vmatpush.msra.mxu0 0.0
        %1436 = vmatpush.msra.mxu0 0.0
        %1437 = vmatpush.msra.mxu0 0.0
        %1438 = vmatpush.msra.mxu0 0.0
        %1439 = vmatpush.msra.mxu0 0.0
        %1440 = vmatpush.msra.mxu0 0.0
        %1441 = vmatpush.msra.mxu0 %v348
        %1442 = vmatmul.f32.gmra.mxu0 %v1403
        %v1443 = vpop.f32.mrf.mxu0
        %v1444 = vadd.f32 0.0, %v1443
        %1445 = vmatmul.f32.gmra.mxu0 %v1406
        %v1446 = vpop.f32.mrf.mxu0
        %v1447 = vadd.f32 0.0, %v1446
        %1448 = vmatmul.f32.gmra.mxu0 %v1409
        %v1449 = vpop.f32.mrf.mxu0
        %v1450 = vadd.f32 0.0, %v1449
        %1451 = vmatmul.f32.gmra.mxu0 %v1412
        %v1452 = vpop.f32.mrf.mxu0
        %v1453 = vadd.f32 0.0, %v1452
        %1454 = vmatmul.f32.gmra.mxu0 %v1415
        %v1455 = vpop.f32.mrf.mxu0
        %v1456 = vadd.f32 0.0, %v1455
        %1457 = vmatmul.f32.gmra.mxu0 %v1418
        %v1458 = vpop.f32.mrf.mxu0
        %v1459 = vadd.f32 0.0, %v1458
        %1460 = vmatmul.f32.gmra.mxu0 %v1421
        %v1461 = vpop.f32.mrf.mxu0
        %v1462 = vadd.f32 0.0, %v1461
        %1463 = vmatmul.f32.gmra.mxu0 %v1424
        %v1464 = vpop.f32.mrf.mxu0
        %v1465 = vadd.f32 0.0, %v1464
        %1466 = vdwg.mxu0
        %1467 = vxpose.xlu0.b32.start [1/16] %v348, 128
        %1468 = vxpose.xlu0.b32.cont [2/16] 0.0, 128
        %1469 = vxpose.xlu0.b32.cont [3/16] 0.0, 128
        %1470 = vxpose.xlu0.b32.cont [4/16] 0.0, 128
        %1471 = vxpose.xlu0.b32.cont [5/16] 0.0, 128
        %1472 = vxpose.xlu0.b32.cont [6/16] 0.0, 128
        %1473 = vxpose.xlu0.b32.cont [7/16] 0.0, 128
        %1474 = vxpose.xlu0.b32.cont [8/16] 0.0, 128
        %1475 = vxpose.xlu0.b32.cont [9/16] 0.0, 128
        %1476 = vxpose.xlu0.b32.cont [10/16] 0.0, 128
        %1477 = vxpose.xlu0.b32.cont [11/16] 0.0, 128
        %1478 = vxpose.xlu0.b32.cont [12/16] 0.0, 128
        %1479 = vxpose.xlu0.b32.cont [13/16] 0.0, 128
        %1480 = vxpose.xlu0.b32.cont [14/16] 0.0, 128
        %1481 = vxpose.xlu0.b32.cont [15/16] 0.0, 128
        %1482 = vxpose.xlu0.b32.end [16/16] 0.0, 128
        %v1483 = vpop.trf.xlu0
        %v1484 = vpop.trf.xlu0
        %v1485 = vpop.trf.xlu0
        %v1486 = vpop.trf.xlu0
        %v1487 = vpop.trf.xlu0
        %v1488 = vpop.trf.xlu0
        %v1489 = vpop.trf.xlu0
        %v1490 = vpop.trf.xlu0
        %v1491 = vpop.trf.xlu0
        %v1492 = vpop.trf.xlu0
        %v1493 = vpop.trf.xlu0
        %v1494 = vpop.trf.xlu0
        %v1495 = vpop.trf.xlu0
        %v1496 = vpop.trf.xlu0
        %v1497 = vpop.trf.xlu0
        %v1498 = vpop.trf.xlu0
        %v1500 = vsel %vm407, %v1483, 0
        %v1503 = vsel %vm407, %v1484, 0
        %v1506 = vsel %vm407, %v1485, 0
        %v1509 = vsel %vm407, %v1486, 0
        %v1512 = vsel %vm407, %v1487, 0
        %v1515 = vsel %vm407, %v1488, 0
        %v1518 = vsel %vm407, %v1489, 0
        %v1521 = vsel %vm407, %v1490, 0
        %1523 = vmatpush.msra.mxu0 0.0
        %1524 = vmatpush.msra.mxu0 0.0
        %1525 = vmatpush.msra.mxu0 0.0
        %1526 = vmatpush.msra.mxu0 0.0
        %1527 = vmatpush.msra.mxu0 0.0
        %1528 = vmatpush.msra.mxu0 0.0
        %1529 = vmatpush.msra.mxu0 0.0
        %1530 = vmatpush.msra.mxu0 0.0
        %1531 = vmatpush.msra.mxu0 0.0
        %1532 = vmatpush.msra.mxu0 0.0
        %1533 = vmatpush.msra.mxu0 0.0
        %1534 = vmatpush.msra.mxu0 0.0
        %1535 = vmatpush.msra.mxu0 0.0
        %1536 = vmatpush.msra.mxu0 0.0
        %1537 = vmatpush.msra.mxu0 0.0
        %1538 = vmatpush.msra.mxu0 %v360
        %1539 = vmatmul.f32.gmra.mxu0 %v1500
        %v1540 = vpop.f32.mrf.mxu0
        %v1541 = vadd.f32 %v1444, %v1540
        %1542 = vmatmul.f32.gmra.mxu0 %v1503
        %v1543 = vpop.f32.mrf.mxu0
        %v1544 = vadd.f32 %v1447, %v1543
        %1545 = vmatmul.f32.gmra.mxu0 %v1506
        %v1546 = vpop.f32.mrf.mxu0
        %v1547 = vadd.f32 %v1450, %v1546
        %1548 = vmatmul.f32.gmra.mxu0 %v1509
        %v1549 = vpop.f32.mrf.mxu0
        %v1550 = vadd.f32 %v1453, %v1549
        %1551 = vmatmul.f32.gmra.mxu0 %v1512
        %v1552 = vpop.f32.mrf.mxu0
        %v1553 = vadd.f32 %v1456, %v1552
        %1554 = vmatmul.f32.gmra.mxu0 %v1515
        %v1555 = vpop.f32.mrf.mxu0
        %v1556 = vadd.f32 %v1459, %v1555
        %1557 = vmatmul.f32.gmra.mxu0 %v1518
        %v1558 = vpop.f32.mrf.mxu0
        %v1559 = vadd.f32 %v1462, %v1558
        %1560 = vmatmul.f32.gmra.mxu0 %v1521
        %v1561 = vpop.f32.mrf.mxu0
        %v1562 = vadd.f32 %v1465, %v1561
        %1563 = vdwg.mxu0
        %v1564 = vsel %vm570, %v1541, -inf
        %1565 = vmax.xlane.f32.xlu0 %v1564
        %v1566 = vpop.xlane.xlu0 %1565
        %v1567 = vsel %vm570, %v1544, -inf
        %1568 = vmax.xlane.f32.xlu0 %v1567
        %v1569 = vpop.xlane.xlu0 %1568
        %v1570 = vsel %vm570, %v1547, -inf
        %1571 = vmax.xlane.f32.xlu0 %v1570
        %v1572 = vpop.xlane.xlu0 %1571
        %v1573 = vsel %vm570, %v1550, -inf
        %1574 = vmax.xlane.f32.xlu0 %v1573
        %v1575 = vpop.xlane.xlu0 %1574
        %v1576 = vsel %vm570, %v1553, -inf
        %1577 = vmax.xlane.f32.xlu0 %v1576
        %v1578 = vpop.xlane.xlu0 %1577
        %v1579 = vsel %vm570, %v1556, -inf
        %1580 = vmax.xlane.f32.xlu0 %v1579
        %v1581 = vpop.xlane.xlu0 %1580
        %v1582 = vsel %vm570, %v1559, -inf
        %1583 = vmax.xlane.f32.xlu0 %v1582
        %v1584 = vpop.xlane.xlu0 %1583
        %v1585 = vsel %vm570, %v1562, -inf
        %1586 = vmax.xlane.f32.xlu0 %v1585
        %v1587 = vpop.xlane.xlu0 %1586
        %v1588 = vsub.f32 %v1541, %v1566
        %v1589 = vsub.f32 %v1544, %v1569
        %v1590 = vsub.f32 %v1547, %v1572
        %v1591 = vsub.f32 %v1550, %v1575
        %v1592 = vsub.f32 %v1553, %v1578
        %v1593 = vsub.f32 %v1556, %v1581
        %v1594 = vsub.f32 %v1559, %v1584
        %v1595 = vsub.f32 %v1562, %v1587
        %v1596 = vmul.f32 %v1588, 1.442695
        %v1597 = vpow.pop %v1596
        %v1598 = vmul.f32 %v1589, 1.442695
        %v1599 = vpow.pop %v1598
        %v1600 = vmul.f32 %v1590, 1.442695
        %v1601 = vpow.pop %v1600
        %v1602 = vmul.f32 %v1591, 1.442695
        %v1603 = vpow.pop %v1602
        %v1604 = vmul.f32 %v1592, 1.442695
        %v1605 = vpow.pop %v1604
        %v1606 = vmul.f32 %v1593, 1.442695
        %v1607 = vpow.pop %v1606
        %v1608 = vmul.f32 %v1594, 1.442695
        %v1609 = vpow.pop %v1608
        %v1610 = vmul.f32 %v1595, 1.442695
        %v1611 = vpow.pop %v1610
        %v1612 = vsel %vm570, %v1597, 0.0
        %1613 = vadd.xlane.f32.xlu0 %v1612
        %v1614 = vpop.xlane.xlu0 %1613
        %v1615 = vsel %vm570, %v1599, 0.0
        %1616 = vadd.xlane.f32.xlu0 %v1615
        %v1617 = vpop.xlane.xlu0 %1616
        %v1618 = vsel %vm570, %v1601, 0.0
        %1619 = vadd.xlane.f32.xlu0 %v1618
        %v1620 = vpop.xlane.xlu0 %1619
        %v1621 = vsel %vm570, %v1603, 0.0
        %1622 = vadd.xlane.f32.xlu0 %v1621
        %v1623 = vpop.xlane.xlu0 %1622
        %v1624 = vsel %vm570, %v1605, 0.0
        %1625 = vadd.xlane.f32.xlu0 %v1624
        %v1626 = vpop.xlane.xlu0 %1625
        %v1627 = vsel %vm570, %v1607, 0.0
        %1628 = vadd.xlane.f32.xlu0 %v1627
        %v1629 = vpop.xlane.xlu0 %1628
        %v1630 = vsel %vm570, %v1609, 0.0
        %1631 = vadd.xlane.f32.xlu0 %v1630
        %v1632 = vpop.xlane.xlu0 %1631
        %v1633 = vsel %vm570, %v1611, 0.0
        %1634 = vadd.xlane.f32.xlu0 %v1633
        %v1635 = vpop.xlane.xlu0 %1634
        %v1636 = vrcp.pop %v1614
        %v1637 = vrcp.pop %v1617
        %v1638 = vrcp.pop %v1620
        %v1639 = vrcp.pop %v1623
        %v1640 = vrcp.pop %v1626
        %v1641 = vrcp.pop %v1629
        %v1642 = vrcp.pop %v1632
        %v1643 = vrcp.pop %v1635
        %v1644 = vmul.f32 %v1597, %v1636
        %v1645 = vmul.f32 %v1599, %v1637
        %v1646 = vmul.f32 %v1601, %v1638
        %v1647 = vmul.f32 %v1603, %v1639
        %v1648 = vmul.f32 %v1605, %v1640
        %v1649 = vmul.f32 %v1607, %v1641
        %v1650 = vmul.f32 %v1609, %v1642
        %v1651 = vmul.f32 %v1611, %v1643
        %v1653 = vsel %vm570, %v372, 0
        %v1656 = vsel %vm570, %v1644, 0
        %v1659 = vsel %vm570, %v1645, 0
        %v1662 = vsel %vm570, %v1646, 0
        %v1665 = vsel %vm570, %v1647, 0
        %v1668 = vsel %vm570, %v1648, 0
        %v1671 = vsel %vm570, %v1649, 0
        %v1674 = vsel %vm570, %v1650, 0
        %v1677 = vsel %vm570, %v1651, 0
        %1679 = vmatpush.xpose.msra.mxu0 0.0
        %1680 = vmatpush.xpose.msra.mxu0 0.0
        %1681 = vmatpush.xpose.msra.mxu0 0.0
        %1682 = vmatpush.xpose.msra.mxu0 0.0
        %1683 = vmatpush.xpose.msra.mxu0 0.0
        %1684 = vmatpush.xpose.msra.mxu0 0.0
        %1685 = vmatpush.xpose.msra.mxu0 0.0
        %1686 = vmatpush.xpose.msra.mxu0 0.0
        %1687 = vmatpush.xpose.msra.mxu0 %v1677
        %1688 = vmatpush.xpose.msra.mxu0 %v1674
        %1689 = vmatpush.xpose.msra.mxu0 %v1671
        %1690 = vmatpush.xpose.msra.mxu0 %v1668
        %1691 = vmatpush.xpose.msra.mxu0 %v1665
        %1692 = vmatpush.xpose.msra.mxu0 %v1662
        %1693 = vmatpush.xpose.msra.mxu0 %v1659
        %1694 = vmatpush.xpose.msra.mxu0 %v1656
        %1695 = vmatmul.f32.gmra.mxu0 %v1653
        %v1696 = vpop.f32.mrf.mxu0
        %v1697 = vadd.f32 0.0, %v1696
        %1698 = vdwg.mxu0
        %1700 = vrot.lane.b32.xlu0 %v1035, 64
        %v1701 = vpop.permute.xlu0 %1700
        %1704 = vrot.lane.b32.xlu0 %v1697, 64
        %v1705 = vpop.permute.xlu0 %1704
        %v1707 = vsel %vm570, %v704, %v1701
        %v1708 = vsel %vm570, %v1366, %v1705
        %1709 = vst [vmem:[%s190] sm:$0xff] %v1707
        %1710 = vst [vmem:[%s190 + $0x8] sm:$0xff] %v1708
        %s1711 = sand.u32 %s115, 1
        %s1712 = scalar_lea.sflag [#allocation3], %s1711
        %s1713 = sand.u32 %s115, 1
        %s1714 = smul.addr %s1713, 16
        %s1715 = scalar_lea.vmem [#allocation2], %s1714
        // Predicated region
        $region37: #{tpu_custom_call.1} parent=35 // pred_check
          %p1716 = pneg %p125
        $region38: #{tpu_custom_call.1} parent=35 // pred_check_branch
          %1718 = sbr.rel (%p1716) target = $region40
        $region39: #{tpu_custom_call.1} parent=35 // pred_region
          %1720 = vsyncadd %s1712, 0
          %s1721 = smul.addr %s18, 2
          %s1722 = smul.addr %s1721, 8
          %s1723 = scalar_lea.hbm %s4, %s1722
          %s1725 = sshll.u32 %s1715, 4
          %s1726 = int_to_ptr.vmem [resolvable:$true] %s1725
          %s1727 = sshll.u32 %s1723, 4
          %s1728 = int_to_ptr.hbm [resolvable:$true] %s1727
          %1730 = dma.vmem_to_hbm [thread:$0]  %s1726, 256, %s1728, %s1712
        $region40: #{tpu_custom_call.1} parent=35 // pred_fallthru
          _
      $region36: #{tpu_custom_call.1} parent=5 // pred_fallthru
        _
      %p1731 = scmp.le.s32.totalorder 2, %s13
      // Predicated region
      $region41: #{tpu_custom_call.1} parent=5 // pred_check
        %p1732 = pneg %p1731
      $region42: #{tpu_custom_call.1} parent=5 // pred_check_branch
        %1734 = sbr.rel (%p1732) target = $region44
      $region43: #{tpu_custom_call.1} parent=5 // pred_region
        %s1735 = ssub.s32 %s13, 2
        // Predicated region
        $region45: #{tpu_custom_call.1} parent=43 // pred_check
          %p1736 = pneg %p131
        $region46: #{tpu_custom_call.1} parent=43 // pred_check_branch
          %1738 = sbr.rel (%p1736) target = $region48
        $region47: #{tpu_custom_call.1} parent=43 // pred_region
          %s1739 = sand.u32 %s116, 1
          %s1740 = scalar_lea.sflag [#allocation3], %s1739
          %s1741 = sand.u32 %s116, 1
          %s1742 = smul.addr %s1741, 16
          %s1743 = scalar_lea.vmem [#allocation2], %s1742
          %1745 = dma.done %s1740, 256
        $region48: #{tpu_custom_call.1} parent=43 // pred_fallthru
          _
      $region44: #{tpu_custom_call.1} parent=5 // pred_fallthru
        _
    $region6: #{tpu_custom_call.1} parent=1 // loop_footer
      %s17 = sadd.s32 1, %s13
    $region7: #{tpu_custom_call.1} parent=1 // loop_footer_branch
      %12 = sbr.rel target = $region3
    $region8: #{tpu_custom_call.1} parent=1 // loop_exit
      _
    %1746 = vsyncpa [#allocation3], 1
    %s1747 = scalar_lea.sflag [#allocation3], 1
    %1748 = vsyncpa %s1747, 1

</llo_original>
